<compile_context>
chip_gen: v7x
topology: tpu7x:2x2x1
jax: 0.10.0
libtpu: 0.0.40
codegen_flags: <defaults>
</compile_context>

<pallas_src>
import jax
import jax.numpy as jnp
from jax.experimental import pallas as pl
from jax.experimental.pallas import tpu as pltpu

# ----- model hyper-parameters (small, consistent with the module) -----
B, N, C = 2, 8, 32          # batch, tokens, embedding dim
NUM_HEADS = 4               # head_dim = 8
HEAD_DIM = C // NUM_HEADS
MLP_RATIO = 4.0
HID = int(C * MLP_RATIO)    # 128
EPS = 1e-5                  # nn.LayerNorm default eps
_INV_SQRT2 = 0.7071067811865476


def _erf(x):
    # Numerical-Recipes erfc polynomial (|rel err| ~1e-7 before the approx recip);
    # nn.GELU() default is the exact (erf-based) GELU.  Hand-rolled because
    # lax.erf has no guaranteed Mosaic lowering.
    a = jnp.abs(x)
    t = pl.reciprocal(1.0 + 0.5 * a, approx=True)          # EUP divide
    poly = (-1.26551223 + t * (1.00002368 + t * (0.37409196 + t * (0.09678418 +
            t * (-0.18628806 + t * (0.27886807 + t * (-1.13520398 + t * (1.48851587 +
            t * (-0.82215223 + t * 0.17087277)))))))))
    erfc = t * jnp.exp(-a * a + poly)
    return jnp.where(x >= 0.0, 1.0 - erfc, erfc - 1.0)


def _gelu_exact(x):
    return 0.5 * x * (1.0 + _erf(x * _INV_SQRT2))


def transformer_block_kernel(x_ref, g1_ref, b1_ref, g2_ref, b2_ref,
                             wqkv_ref, wproj_ref, wfc1_ref, wfc2_ref,
                             bfc1_ref, bfc2_ref, wsc_ref, o_ref):
    x = x_ref[...]                                    # (B*N, C) fp32
    H, Dh = NUM_HEADS, HEAD_DIM
    BN = B * N

    # per-tensor weight scales as SMEM scalar reads (no vector slices/broadcasts)
    s_wqkv = wsc_ref[0]
    s_wproj = wsc_ref[1]
    s_wfc1 = wsc_ref[2]
    s_wfc2 = wsc_ref[3]

    def layernorm(v, g, b):
        mu = jnp.mean(v, axis=-1, keepdims=True)
        var = jnp.mean(jnp.square(v - mu), axis=-1, keepdims=True)
        return (v - mu) * jax.lax.rsqrt(var + EPS) * g + b

    def quantize(v):
        # dynamic symmetric int8, per-row (per-token) scale; integer values kept
        # in bf16 (exact) so the MXU can consume them natively.
        amax = jnp.maximum(jnp.max(jnp.abs(v), axis=-1, keepdims=True), 1e-12)  # (M,1)
        inv = 127.0 * pl.reciprocal(amax, approx=True)
        q = jnp.clip(jnp.round(v * inv), -127.0, 127.0)
        return q.astype(jnp.bfloat16), amax * (1.0 / 127.0)                     # (M,1)

    def qmatmul(q_act, s_act, w_ref, s_w):
        # bf16 x bf16 integer matmul on the MXU; exact fp32 accumulation
        # (K <= 128 => sums < 2^24); dequantize with row-scale * scalar weight scale.
        acc = jnp.dot(q_act, w_ref[...], preferred_element_type=jnp.float32)
        return acc * (s_act * s_w)

    # ---------------- attention branch ----------------
    xn1 = layernorm(x, g1_ref[...], b1_ref[...])                 # fp32
    xq, s_x1 = quantize(xn1)
    qkv = qmatmul(xq, s_x1, wqkv_ref, s_wqkv)                    # (BN, 3C) fp32

    # Head gather: one reshape + one transpose (last dim stays minor) instead of
    # per-head slices / stacks.  Feature axis of qkv is (3, H, Dh) flattened.
    qkvt = jnp.transpose(qkv.reshape(BN, 3 * H, Dh), (1, 0, 2))  # (3H, BN, Dh)
    q = qkvt[0 * H:1 * H].reshape(H * B, N, Dh).astype(jnp.bfloat16)
    k = qkvt[1 * H:2 * H].reshape(H * B, N, Dh).astype(jnp.bfloat16)
    v = qkvt[2 * H:3 * H].reshape(H * B, N, Dh).astype(jnp.bfloat16)

    # bf16 operands, fp32 accumulation (single-pass MXU); fp32 softmax.
    s = jnp.einsum('bqd,bkd->bqk', q, k,
                   preferred_element_type=jnp.float32) * (Dh ** -0.5)
    s = s - jnp.max(s, axis=-1, keepdims=True)
    p = jnp.exp(s)
    p = p * pl.reciprocal(jnp.sum(p, axis=-1, keepdims=True), approx=True)
    o = jnp.einsum('bqk,bkd->bqd', p.astype(jnp.bfloat16), v,
                   preferred_element_type=jnp.float32)           # (H*B, N, Dh) fp32

    # Inverse gather: (H*B,N,Dh) -> (H,BN,Dh) -> (BN,H,Dh) -> (BN, C)
    attn = jnp.transpose(o.reshape(H, BN, Dh), (1, 0, 2)).reshape(BN, C)

    aq, s_a = quantize(attn)
    x = x + qmatmul(aq, s_a, wproj_ref, s_wproj)                 # fp32 residual

    # ---------------- MLP branch ----------------
    xn2 = layernorm(x, g2_ref[...], b2_ref[...])
    x2q, s_x2 = quantize(xn2)
    h1 = qmatmul(x2q, s_x2, wfc1_ref, s_wfc1) + bfc1_ref[...]
    h1 = _gelu_exact(h1)                                         # fp32 elementwise
    h1q, s_h1 = quantize(h1)
    h2 = qmatmul(h1q, s_h1, wfc2_ref, s_wfc2) + bfc2_ref[...]
    o_ref[...] = x + h2                                          # fp32 residual


def transformer_block(x, params):
    vmem = pl.BlockSpec(memory_space=pltpu.MemorySpace.VMEM)
    smem = pl.BlockSpec(memory_space=pltpu.MemorySpace.SMEM)
    cost = pl.CostEstimate(flops=450_000, transcendentals=3_000, bytes_accessed=35_000)
    f = pl.pallas_call(
        transformer_block_kernel,
        out_shape=jax.ShapeDtypeStruct((B * N, C), jnp.float32),
        in_specs=[vmem] * 11 + [smem],
        out_specs=vmem,
        compiler_params=pltpu.CompilerParams(vmem_limit_bytes=32 * 1024 * 1024),
        cost_estimate=cost,
    )
    y = f(x.reshape(B * N, C),
          params["g1"], params["b1"], params["g2"], params["b2"],
          params["wqkv"], params["wproj"], params["wfc1"], params["wfc2"],
          params["bfc1"], params["bfc2"], params["w_scales"])
    return y.reshape(B, N, C)


def _quantize_weight(w):
    # per-tensor symmetric int8; keep integer values (exact in bf16) + fp32 scale
    s = jnp.maximum(jnp.max(jnp.abs(w)), 1e-12) / 127.0
    q = jnp.clip(jnp.round(w / s), -127.0, 127.0)
    return q.astype(jnp.bfloat16), s.astype(jnp.float32)


def init_params(key):
    ks = jax.random.split(key, 6)
    p = {}
    # LayerNorm params (PyTorch init: weight=1, bias=0), 2-D for lane-dense broadcast
    p["g1"] = jnp.ones((1, C), jnp.float32)
    p["b1"] = jnp.zeros((1, C), jnp.float32)
    p["g2"] = jnp.ones((1, C), jnp.float32)
    p["b2"] = jnp.zeros((1, C), jnp.float32)
    # Linear weights stored as (in, out); qkv/proj have no bias (qkv_bias=False)
    wqkv, s_qkv = _quantize_weight(0.05 * jax.random.normal(ks[0], (C, 3 * C), jnp.float32))
    wproj, s_proj = _quantize_weight(0.05 * jax.random.normal(ks[1], (C, C), jnp.float32))
    wfc1, s_fc1 = _quantize_weight(0.05 * jax.random.normal(ks[2], (C, HID), jnp.float32))
    wfc2, s_fc2 = _quantize_weight(0.05 * jax.random.normal(ks[4], (HID, C), jnp.float32))
    p["wqkv"], p["wproj"], p["wfc1"], p["wfc2"] = wqkv, wproj, wfc1, wfc2
    # per-tensor weight scales, 1-D fp32 -> SMEM scalar reads inside the kernel
    p["w_scales"] = jnp.stack([s_qkv, s_proj, s_fc1, s_fc2]).reshape(4,)
    p["bfc1"] = 0.01 * jax.random.normal(ks[3], (1, HID), jnp.float32)
    p["bfc2"] = 0.01 * jax.random.normal(ks[5], (1, C), jnp.float32)
    return p


if __name__ == "__main__":
    key = jax.random.PRNGKey(0)
    kx, kp = jax.random.split(key)
    x = jax.random.normal(kx, (B, N, C), jnp.float32)
    params = init_params(kp)

    y = jax.jit(transformer_block)(x, params)
    jax.block_until_ready(y)
    assert y.shape == (B, N, C) and y.dtype == jnp.float32
    assert bool(jnp.all(jnp.isfinite(y)))
    print("KERNEL_OK")
</pallas_src>

<mosaic_0001>
module attributes {stable_mosaic.version = 11 : i64} {
  func.func @transformer_block_kernel(%arg0: memref<16x32xf32, #tpu.memory_space<vmem>>, %arg1: memref<1x32xf32, #tpu.memory_space<vmem>>, %arg2: memref<1x32xf32, #tpu.memory_space<vmem>>, %arg3: memref<1x32xf32, #tpu.memory_space<vmem>>, %arg4: memref<1x32xf32, #tpu.memory_space<vmem>>, %arg5: memref<32x96xbf16, #tpu.memory_space<vmem>>, %arg6: memref<32x32xbf16, #tpu.memory_space<vmem>>, %arg7: memref<32x128xbf16, #tpu.memory_space<vmem>>, %arg8: memref<128x32xbf16, #tpu.memory_space<vmem>>, %arg9: memref<1x128xf32, #tpu.memory_space<vmem>>, %arg10: memref<1x32xf32, #tpu.memory_space<vmem>>, %arg11: memref<4xf32, #tpu.memory_space<smem>>, %arg12: memref<16x32xf32, #tpu.memory_space<vmem>>) attributes {dimension_semantics = [], scalar_prefetch = 0 : i64, scratch_operands = 0 : i64, tpu.core_type = #tpu.core_type<tc>} {
    %c0 = arith.constant 0 : index
    %c0_0 = arith.constant 0 : index
    %0 = vector.load %arg0[%c0, %c0_0] : memref<16x32xf32, #tpu.memory_space<vmem>>, vector<16x32xf32>
    %c0_1 = arith.constant 0 : index
    %1 = memref.load %arg11[%c0_1] : memref<4xf32, #tpu.memory_space<smem>>
    %c1 = arith.constant 1 : index
    %2 = memref.load %arg11[%c1] : memref<4xf32, #tpu.memory_space<smem>>
    %c2 = arith.constant 2 : index
    %3 = memref.load %arg11[%c2] : memref<4xf32, #tpu.memory_space<smem>>
    %c3 = arith.constant 3 : index
    %4 = memref.load %arg11[%c3] : memref<4xf32, #tpu.memory_space<smem>>
    %c0_2 = arith.constant 0 : index
    %c0_3 = arith.constant 0 : index
    %5 = vector.load %arg1[%c0_2, %c0_3] : memref<1x32xf32, #tpu.memory_space<vmem>>, vector<1x32xf32>
    %c0_4 = arith.constant 0 : index
    %c0_5 = arith.constant 0 : index
    %6 = vector.load %arg2[%c0_4, %c0_5] : memref<1x32xf32, #tpu.memory_space<vmem>>, vector<1x32xf32>
    %cst = arith.constant dense<0.000000e+00> : vector<16xf32>
    %7 = vector.multi_reduction <add>, %0, %cst [1] : vector<16x32xf32> to vector<16xf32>
    %8 = vector.shape_cast %7 : vector<16xf32> to vector<16x1xf32>
    %cst_6 = arith.constant 3.200000e+01 : f32
    %9 = vector.broadcast %cst_6 : f32 to vector<16x1xf32>
    %10 = arith.divf %8, %9 : vector<16x1xf32>
    %11 = vector.broadcast %10 : vector<16x1xf32> to vector<16x32xf32>
    %12 = arith.subf %0, %11 : vector<16x32xf32>
    %13 = arith.mulf %12, %12 : vector<16x32xf32>
    %cst_7 = arith.constant dense<0.000000e+00> : vector<16xf32>
    %14 = vector.multi_reduction <add>, %13, %cst_7 [1] : vector<16x32xf32> to vector<16xf32>
    %15 = vector.shape_cast %14 : vector<16xf32> to vector<16x1xf32>
    %cst_8 = arith.constant 3.200000e+01 : f32
    %16 = vector.broadcast %cst_8 : f32 to vector<16x1xf32>
    %17 = arith.divf %15, %16 : vector<16x1xf32>
    %18 = vector.broadcast %10 : vector<16x1xf32> to vector<16x32xf32>
    %19 = arith.subf %0, %18 : vector<16x32xf32>
    %cst_9 = arith.constant 9.99999974E-6 : f32
    %20 = vector.broadcast %cst_9 : f32 to vector<16x1xf32>
    %21 = arith.addf %17, %20 : vector<16x1xf32>
    %22 = math.rsqrt %21 : vector<16x1xf32>
    %23 = vector.broadcast %22 : vector<16x1xf32> to vector<16x32xf32>
    %24 = arith.mulf %19, %23 : vector<16x32xf32>
    %25 = vector.broadcast %5 : vector<1x32xf32> to vector<16x32xf32>
    %26 = arith.mulf %24, %25 : vector<16x32xf32>
    %27 = vector.broadcast %6 : vector<1x32xf32> to vector<16x32xf32>
    %28 = arith.addf %26, %27 : vector<16x32xf32>
    %29 = math.absf %28 : vector<16x32xf32>
    %cst_10 = arith.constant dense<0xFF800000> : vector<16xf32>
    %30 = vector.multi_reduction <maximumf>, %29, %cst_10 [1] : vector<16x32xf32> to vector<16xf32>
    %31 = vector.shape_cast %30 : vector<16xf32> to vector<16x1xf32>
    %cst_11 = arith.constant 9.99999996E-13 : f32
    %32 = vector.broadcast %cst_11 : f32 to vector<16x1xf32>
    %33 = arith.maximumf %31, %32 : vector<16x1xf32>
    %34 = tpu.reciprocal %33 {approx = true} : vector<16x1xf32> -> vector<16x1xf32>
    %cst_12 = arith.constant 1.270000e+02 : f32
    %35 = vector.broadcast %cst_12 : f32 to vector<16x1xf32>
    %36 = arith.mulf %35, %34 : vector<16x1xf32>
    %37 = vector.broadcast %36 : vector<16x1xf32> to vector<16x32xf32>
    %38 = arith.mulf %28, %37 : vector<16x32xf32>
    %39 = math.roundeven %38 : vector<16x32xf32>
    %cst_13 = arith.constant -1.270000e+02 : f32
    %cst_14 = arith.constant 1.270000e+02 : f32
    %40 = vector.broadcast %cst_13 : f32 to vector<16x32xf32>
    %41 = arith.maximumf %40, %39 : vector<16x32xf32>
    %42 = vector.broadcast %cst_14 : f32 to vector<16x32xf32>
    %43 = arith.minimumf %42, %41 : vector<16x32xf32>
    %44 = arith.truncf %43 : vector<16x32xf32> to vector<16x32xbf16>
    %cst_15 = arith.constant 0.00787401571 : f32
    %45 = vector.broadcast %cst_15 : f32 to vector<16x1xf32>
    %46 = arith.mulf %33, %45 : vector<16x1xf32>
    %c0_16 = arith.constant 0 : index
    %c0_17 = arith.constant 0 : index
    %47 = vector.load %arg5[%c0_16, %c0_17] : memref<32x96xbf16, #tpu.memory_space<vmem>>, vector<32x96xbf16>
    %cst_18 = arith.constant dense<0.000000e+00> : vector<16x96xf32>
    %48 = tpu.matmul %44, %47, %cst_18 {dimension_numbers = #tpu.dot_dimension_numbers<[1], [0], [0], [1], [0, 0, 1, 1], [], []>} : vector<16x32xbf16>, vector<32x96xbf16>, vector<16x96xf32> -> vector<16x96xf32>
    %49 = vector.broadcast %1 : f32 to vector<16x1xf32>
    %50 = arith.mulf %46, %49 : vector<16x1xf32>
    %51 = vector.broadcast %50 : vector<16x1xf32> to vector<16x96xf32>
    %52 = arith.mulf %48, %51 : vector<16x96xf32>
    %53 = vector.shape_cast %52 : vector<16x96xf32> to vector<16x12x8xf32>
    %54 = tpu.transpose %53, [1, 0, 2] : vector<16x12x8xf32> -> vector<12x16x8xf32>
    %55 = vector.extract_strided_slice %54 {offsets = [0, 0, 0], sizes = [4, 16, 8], strides = [1, 1, 1]} : vector<12x16x8xf32> to vector<4x16x8xf32>
    %56 = vector.shape_cast %55 : vector<4x16x8xf32> to vector<8x8x8xf32>
    %57 = arith.truncf %56 : vector<8x8x8xf32> to vector<8x8x8xbf16>
    %58 = vector.extract_strided_slice %54 {offsets = [4, 0, 0], sizes = [4, 16, 8], strides = [1, 1, 1]} : vector<12x16x8xf32> to vector<4x16x8xf32>
    %59 = vector.shape_cast %58 : vector<4x16x8xf32> to vector<8x8x8xf32>
    %60 = arith.truncf %59 : vector<8x8x8xf32> to vector<8x8x8xbf16>
    %61 = vector.extract_strided_slice %54 {offsets = [8, 0, 0], sizes = [4, 16, 8], strides = [1, 1, 1]} : vector<12x16x8xf32> to vector<4x16x8xf32>
    %62 = vector.shape_cast %61 : vector<4x16x8xf32> to vector<8x8x8xf32>
    %63 = arith.truncf %62 : vector<8x8x8xf32> to vector<8x8x8xbf16>
    "tpu.trace_start"() <{level = 10 : i32, message = "bqd,bkd->bqk"}> : () -> ()
    %cst_19 = arith.constant dense<0.000000e+00> : vector<8x8x8xf32>
    %64 = tpu.matmul %57, %60, %cst_19 {dimension_numbers = #tpu.dot_dimension_numbers<[2], [2], [1], [1], [0, 0, 0, 1, 1, 1], [0], [0]>} : vector<8x8x8xbf16>, vector<8x8x8xbf16>, vector<8x8x8xf32> -> vector<8x8x8xf32>
    "tpu.trace_stop"() : () -> ()
    %cst_20 = arith.constant 0.353553385 : f32
    %65 = vector.broadcast %cst_20 : f32 to vector<8x8x8xf32>
    %66 = arith.mulf %64, %65 : vector<8x8x8xf32>
    %cst_21 = arith.constant dense<0xFF800000> : vector<8x8xf32>
    %67 = vector.multi_reduction <maximumf>, %66, %cst_21 [2] : vector<8x8x8xf32> to vector<8x8xf32>
    %68 = vector.shape_cast %67 : vector<8x8xf32> to vector<8x8x1xf32>
    %69 = vector.broadcast %68 : vector<8x8x1xf32> to vector<8x8x8xf32>
    %70 = arith.subf %66, %69 : vector<8x8x8xf32>
    %71 = math.exp %70 : vector<8x8x8xf32>
    %cst_22 = arith.constant dense<0.000000e+00> : vector<8x8xf32>
    %72 = vector.multi_reduction <add>, %71, %cst_22 [2] : vector<8x8x8xf32> to vector<8x8xf32>
    %73 = vector.shape_cast %72 : vector<8x8xf32> to vector<8x8x1xf32>
    %74 = tpu.reciprocal %73 {approx = true} : vector<8x8x1xf32> -> vector<8x8x1xf32>
    %75 = vector.broadcast %74 : vector<8x8x1xf32> to vector<8x8x8xf32>
    %76 = arith.mulf %71, %75 : vector<8x8x8xf32>
    %77 = arith.truncf %76 : vector<8x8x8xf32> to vector<8x8x8xbf16>
    "tpu.trace_start"() <{level = 10 : i32, message = "bqk,bkd->bqd"}> : () -> ()
    %cst_23 = arith.constant dense<0.000000e+00> : vector<8x8x8xf32>
    %78 = tpu.matmul %77, %63, %cst_23 {dimension_numbers = #tpu.dot_dimension_numbers<[2], [1], [1], [2], [0, 0, 0, 1, 1, 2], [0], [0]>} : vector<8x8x8xbf16>, vector<8x8x8xbf16>, vector<8x8x8xf32> -> vector<8x8x8xf32>
    "tpu.trace_stop"() : () -> ()
    %79 = vector.shape_cast %78 : vector<8x8x8xf32> to vector<4x16x8xf32>
    %80 = tpu.transpose %79, [1, 0, 2] : vector<4x16x8xf32> -> vector<16x4x8xf32>
    %81 = vector.shape_cast %80 : vector<16x4x8xf32> to vector<16x32xf32>
    %82 = math.absf %81 : vector<16x32xf32>
    %cst_24 = arith.constant dense<0xFF800000> : vector<16xf32>
    %83 = vector.multi_reduction <maximumf>, %82, %cst_24 [1] : vector<16x32xf32> to vector<16xf32>
    %84 = vector.shape_cast %83 : vector<16xf32> to vector<16x1xf32>
    %cst_25 = arith.constant 9.99999996E-13 : f32
    %85 = vector.broadcast %cst_25 : f32 to vector<16x1xf32>
    %86 = arith.maximumf %84, %85 : vector<16x1xf32>
    %87 = tpu.reciprocal %86 {approx = true} : vector<16x1xf32> -> vector<16x1xf32>
    %cst_26 = arith.constant 1.270000e+02 : f32
    %88 = vector.broadcast %cst_26 : f32 to vector<16x1xf32>
    %89 = arith.mulf %88, %87 : vector<16x1xf32>
    %90 = vector.broadcast %89 : vector<16x1xf32> to vector<16x32xf32>
    %91 = arith.mulf %81, %90 : vector<16x32xf32>
    %92 = math.roundeven %91 : vector<16x32xf32>
    %cst_27 = arith.constant -1.270000e+02 : f32
    %cst_28 = arith.constant 1.270000e+02 : f32
    %93 = vector.broadcast %cst_27 : f32 to vector<16x32xf32>
    %94 = arith.maximumf %93, %92 : vector<16x32xf32>
    %95 = vector.broadcast %cst_28 : f32 to vector<16x32xf32>
    %96 = arith.minimumf %95, %94 : vector<16x32xf32>
    %97 = arith.truncf %96 : vector<16x32xf32> to vector<16x32xbf16>
    %cst_29 = arith.constant 0.00787401571 : f32
    %98 = vector.broadcast %cst_29 : f32 to vector<16x1xf32>
    %99 = arith.mulf %86, %98 : vector<16x1xf32>
    %c0_30 = arith.constant 0 : index
    %c0_31 = arith.constant 0 : index
    %100 = vector.load %arg6[%c0_30, %c0_31] : memref<32x32xbf16, #tpu.memory_space<vmem>>, vector<32x32xbf16>
    %cst_32 = arith.constant dense<0.000000e+00> : vector<16x32xf32>
    %101 = tpu.matmul %97, %100, %cst_32 {dimension_numbers = #tpu.dot_dimension_numbers<[1], [0], [0], [1], [0, 0, 1, 1], [], []>} : vector<16x32xbf16>, vector<32x32xbf16>, vector<16x32xf32> -> vector<16x32xf32>
    %102 = vector.broadcast %2 : f32 to vector<16x1xf32>
    %103 = arith.mulf %99, %102 : vector<16x1xf32>
    %104 = vector.broadcast %103 : vector<16x1xf32> to vector<16x32xf32>
    %105 = arith.mulf %101, %104 : vector<16x32xf32>
    %106 = arith.addf %0, %105 : vector<16x32xf32>
    %c0_33 = arith.constant 0 : index
    %c0_34 = arith.constant 0 : index
    %107 = vector.load %arg3[%c0_33, %c0_34] : memref<1x32xf32, #tpu.memory_space<vmem>>, vector<1x32xf32>
    %c0_35 = arith.constant 0 : index
    %c0_36 = arith.constant 0 : index
    %108 = vector.load %arg4[%c0_35, %c0_36] : memref<1x32xf32, #tpu.memory_space<vmem>>, vector<1x32xf32>
    %cst_37 = arith.constant dense<0.000000e+00> : vector<16xf32>
    %109 = vector.multi_reduction <add>, %106, %cst_37 [1] : vector<16x32xf32> to vector<16xf32>
    %110 = vector.shape_cast %109 : vector<16xf32> to vector<16x1xf32>
    %cst_38 = arith.constant 3.200000e+01 : f32
    %111 = vector.broadcast %cst_38 : f32 to vector<16x1xf32>
    %112 = arith.divf %110, %111 : vector<16x1xf32>
    %113 = vector.broadcast %112 : vector<16x1xf32> to vector<16x32xf32>
    %114 = arith.subf %106, %113 : vector<16x32xf32>
    %115 = arith.mulf %114, %114 : vector<16x32xf32>
    %cst_39 = arith.constant dense<0.000000e+00> : vector<16xf32>
    %116 = vector.multi_reduction <add>, %115, %cst_39 [1] : vector<16x32xf32> to vector<16xf32>
    %117 = vector.shape_cast %116 : vector<16xf32> to vector<16x1xf32>
    %cst_40 = arith.constant 3.200000e+01 : f32
    %118 = vector.broadcast %cst_40 : f32 to vector<16x1xf32>
    %119 = arith.divf %117, %118 : vector<16x1xf32>
    %120 = vector.broadcast %112 : vector<16x1xf32> to vector<16x32xf32>
    %121 = arith.subf %106, %120 : vector<16x32xf32>
    %cst_41 = arith.constant 9.99999974E-6 : f32
    %122 = vector.broadcast %cst_41 : f32 to vector<16x1xf32>
    %123 = arith.addf %119, %122 : vector<16x1xf32>
    %124 = math.rsqrt %123 : vector<16x1xf32>
    %125 = vector.broadcast %124 : vector<16x1xf32> to vector<16x32xf32>
    %126 = arith.mulf %121, %125 : vector<16x32xf32>
    %127 = vector.broadcast %107 : vector<1x32xf32> to vector<16x32xf32>
    %128 = arith.mulf %126, %127 : vector<16x32xf32>
    %129 = vector.broadcast %108 : vector<1x32xf32> to vector<16x32xf32>
    %130 = arith.addf %128, %129 : vector<16x32xf32>
    %131 = math.absf %130 : vector<16x32xf32>
    %cst_42 = arith.constant dense<0xFF800000> : vector<16xf32>
    %132 = vector.multi_reduction <maximumf>, %131, %cst_42 [1] : vector<16x32xf32> to vector<16xf32>
    %133 = vector.shape_cast %132 : vector<16xf32> to vector<16x1xf32>
    %cst_43 = arith.constant 9.99999996E-13 : f32
    %134 = vector.broadcast %cst_43 : f32 to vector<16x1xf32>
    %135 = arith.maximumf %133, %134 : vector<16x1xf32>
    %136 = tpu.reciprocal %135 {approx = true} : vector<16x1xf32> -> vector<16x1xf32>
    %cst_44 = arith.constant 1.270000e+02 : f32
    %137 = vector.broadcast %cst_44 : f32 to vector<16x1xf32>
    %138 = arith.mulf %137, %136 : vector<16x1xf32>
    %139 = vector.broadcast %138 : vector<16x1xf32> to vector<16x32xf32>
    %140 = arith.mulf %130, %139 : vector<16x32xf32>
    %141 = math.roundeven %140 : vector<16x32xf32>
    %cst_45 = arith.constant -1.270000e+02 : f32
    %cst_46 = arith.constant 1.270000e+02 : f32
    %142 = vector.broadcast %cst_45 : f32 to vector<16x32xf32>
    %143 = arith.maximumf %142, %141 : vector<16x32xf32>
    %144 = vector.broadcast %cst_46 : f32 to vector<16x32xf32>
    %145 = arith.minimumf %144, %143 : vector<16x32xf32>
    %146 = arith.truncf %145 : vector<16x32xf32> to vector<16x32xbf16>
    %cst_47 = arith.constant 0.00787401571 : f32
    %147 = vector.broadcast %cst_47 : f32 to vector<16x1xf32>
    %148 = arith.mulf %135, %147 : vector<16x1xf32>
    %c0_48 = arith.constant 0 : index
    %c0_49 = arith.constant 0 : index
    %149 = vector.load %arg7[%c0_48, %c0_49] : memref<32x128xbf16, #tpu.memory_space<vmem>>, vector<32x128xbf16>
    %cst_50 = arith.constant dense<0.000000e+00> : vector<16x128xf32>
    %150 = tpu.matmul %146, %149, %cst_50 {dimension_numbers = #tpu.dot_dimension_numbers<[1], [0], [0], [1], [0, 0, 1, 1], [], []>} : vector<16x32xbf16>, vector<32x128xbf16>, vector<16x128xf32> -> vector<16x128xf32>
    %151 = vector.broadcast %3 : f32 to vector<16x1xf32>
    %152 = arith.mulf %148, %151 : vector<16x1xf32>
    %153 = vector.broadcast %152 : vector<16x1xf32> to vector<16x128xf32>
    %154 = arith.mulf %150, %153 : vector<16x128xf32>
    %c0_51 = arith.constant 0 : index
    %c0_52 = arith.constant 0 : index
    %155 = vector.load %arg9[%c0_51, %c0_52] : memref<1x128xf32, #tpu.memory_space<vmem>>, vector<1x128xf32>
    %156 = vector.broadcast %155 : vector<1x128xf32> to vector<16x128xf32>
    %157 = arith.addf %154, %156 : vector<16x128xf32>
    %cst_53 = arith.constant 5.000000e-01 : f32
    %158 = vector.broadcast %cst_53 : f32 to vector<16x128xf32>
    %159 = arith.mulf %158, %157 : vector<16x128xf32>
    %cst_54 = arith.constant 0.707106769 : f32
    %160 = vector.broadcast %cst_54 : f32 to vector<16x128xf32>
    %161 = arith.mulf %157, %160 : vector<16x128xf32>
    %162 = math.absf %161 : vector<16x128xf32>
    %cst_55 = arith.constant 5.000000e-01 : f32
    %163 = vector.broadcast %cst_55 : f32 to vector<16x128xf32>
    %164 = arith.mulf %163, %162 : vector<16x128xf32>
    %cst_56 = arith.constant 1.000000e+00 : f32
    %165 = vector.broadcast %cst_56 : f32 to vector<16x128xf32>
    %166 = arith.addf %165, %164 : vector<16x128xf32>
    %167 = tpu.reciprocal %166 {approx = true} : vector<16x128xf32> -> vector<16x128xf32>
    %cst_57 = arith.constant 0.170872763 : f32
    %168 = vector.broadcast %cst_57 : f32 to vector<16x128xf32>
    %169 = arith.mulf %167, %168 : vector<16x128xf32>
    %cst_58 = arith.constant -0.822152256 : f32
    %170 = vector.broadcast %cst_58 : f32 to vector<16x128xf32>
    %171 = arith.addf %170, %169 : vector<16x128xf32>
    %172 = arith.mulf %167, %171 : vector<16x128xf32>
    %cst_59 = arith.constant 1.48851585 : f32
    %173 = vector.broadcast %cst_59 : f32 to vector<16x128xf32>
    %174 = arith.addf %173, %172 : vector<16x128xf32>
    %175 = arith.mulf %167, %174 : vector<16x128xf32>
    %cst_60 = arith.constant -1.13520396 : f32
    %176 = vector.broadcast %cst_60 : f32 to vector<16x128xf32>
    %177 = arith.addf %176, %175 : vector<16x128xf32>
    %178 = arith.mulf %167, %177 : vector<16x128xf32>
    %cst_61 = arith.constant 0.278868079 : f32
    %179 = vector.broadcast %cst_61 : f32 to vector<16x128xf32>
    %180 = arith.addf %179, %178 : vector<16x128xf32>
    %181 = arith.mulf %167, %180 : vector<16x128xf32>
    %cst_62 = arith.constant -0.186288059 : f32
    %182 = vector.broadcast %cst_62 : f32 to vector<16x128xf32>
    %183 = arith.addf %182, %181 : vector<16x128xf32>
    %184 = arith.mulf %167, %183 : vector<16x128xf32>
    %cst_63 = arith.constant 0.0967841818 : f32
    %185 = vector.broadcast %cst_63 : f32 to vector<16x128xf32>
    %186 = arith.addf %185, %184 : vector<16x128xf32>
    %187 = arith.mulf %167, %186 : vector<16x128xf32>
    %cst_64 = arith.constant 0.374091953 : f32
    %188 = vector.broadcast %cst_64 : f32 to vector<16x128xf32>
    %189 = arith.addf %188, %187 : vector<16x128xf32>
    %190 = arith.mulf %167, %189 : vector<16x128xf32>
    %cst_65 = arith.constant 1.00002372 : f32
    %191 = vector.broadcast %cst_65 : f32 to vector<16x128xf32>
    %192 = arith.addf %191, %190 : vector<16x128xf32>
    %193 = arith.mulf %167, %192 : vector<16x128xf32>
    %cst_66 = arith.constant -1.26551223 : f32
    %194 = vector.broadcast %cst_66 : f32 to vector<16x128xf32>
    %195 = arith.addf %194, %193 : vector<16x128xf32>
    %cst_67 = arith.constant 0.000000e+00 : f32
    %196 = vector.broadcast %cst_67 : f32 to vector<16x128xf32>
    %197 = arith.subf %196, %162 : vector<16x128xf32>
    %198 = arith.mulf %197, %162 : vector<16x128xf32>
    %199 = arith.addf %198, %195 : vector<16x128xf32>
    %200 = math.exp %199 : vector<16x128xf32>
    %201 = arith.mulf %167, %200 : vector<16x128xf32>
    %cst_68 = arith.constant 0.000000e+00 : f32
    %202 = vector.broadcast %cst_68 : f32 to vector<16x128xf32>
    %203 = arith.cmpf oge, %161, %202 : vector<16x128xf32>
    %cst_69 = arith.constant 1.000000e+00 : f32
    %204 = vector.broadcast %cst_69 : f32 to vector<16x128xf32>
    %205 = arith.subf %204, %201 : vector<16x128xf32>
    %cst_70 = arith.constant 1.000000e+00 : f32
    %206 = vector.broadcast %cst_70 : f32 to vector<16x128xf32>
    %207 = arith.subf %201, %206 : vector<16x128xf32>
    %208 = arith.select %203, %205, %207 : vector<16x128xi1>, vector<16x128xf32>
    %cst_71 = arith.constant 1.000000e+00 : f32
    %209 = vector.broadcast %cst_71 : f32 to vector<16x128xf32>
    %210 = arith.addf %209, %208 : vector<16x128xf32>
    %211 = arith.mulf %159, %210 : vector<16x128xf32>
    %212 = math.absf %211 : vector<16x128xf32>
    %cst_72 = arith.constant dense<0xFF800000> : vector<16xf32>
    %213 = vector.multi_reduction <maximumf>, %212, %cst_72 [1] : vector<16x128xf32> to vector<16xf32>
    %214 = vector.shape_cast %213 : vector<16xf32> to vector<16x1xf32>
    %cst_73 = arith.constant 9.99999996E-13 : f32
    %215 = vector.broadcast %cst_73 : f32 to vector<16x1xf32>
    %216 = arith.maximumf %214, %215 : vector<16x1xf32>
    %217 = tpu.reciprocal %216 {approx = true} : vector<16x1xf32> -> vector<16x1xf32>
    %cst_74 = arith.constant 1.270000e+02 : f32
    %218 = vector.broadcast %cst_74 : f32 to vector<16x1xf32>
    %219 = arith.mulf %218, %217 : vector<16x1xf32>
    %220 = vector.broadcast %219 : vector<16x1xf32> to vector<16x128xf32>
    %221 = arith.mulf %211, %220 : vector<16x128xf32>
    %222 = math.roundeven %221 : vector<16x128xf32>
    %cst_75 = arith.constant -1.270000e+02 : f32
    %cst_76 = arith.constant 1.270000e+02 : f32
    %223 = vector.broadcast %cst_75 : f32 to vector<16x128xf32>
    %224 = arith.maximumf %223, %222 : vector<16x128xf32>
    %225 = vector.broadcast %cst_76 : f32 to vector<16x128xf32>
    %226 = arith.minimumf %225, %224 : vector<16x128xf32>
    %227 = arith.truncf %226 : vector<16x128xf32> to vector<16x128xbf16>
    %cst_77 = arith.constant 0.00787401571 : f32
    %228 = vector.broadcast %cst_77 : f32 to vector<16x1xf32>
    %229 = arith.mulf %216, %228 : vector<16x1xf32>
    %c0_78 = arith.constant 0 : index
    %c0_79 = arith.constant 0 : index
    %230 = vector.load %arg8[%c0_78, %c0_79] : memref<128x32xbf16, #tpu.memory_space<vmem>>, vector<128x32xbf16>
    %cst_80 = arith.constant dense<0.000000e+00> : vector<16x32xf32>
    %231 = tpu.matmul %227, %230, %cst_80 {dimension_numbers = #tpu.dot_dimension_numbers<[1], [0], [0], [1], [0, 0, 1, 1], [], []>} : vector<16x128xbf16>, vector<128x32xbf16>, vector<16x32xf32> -> vector<16x32xf32>
    %232 = vector.broadcast %4 : f32 to vector<16x1xf32>
    %233 = arith.mulf %229, %232 : vector<16x1xf32>
    %234 = vector.broadcast %233 : vector<16x1xf32> to vector<16x32xf32>
    %235 = arith.mulf %231, %234 : vector<16x32xf32>
    %c0_81 = arith.constant 0 : index
    %c0_82 = arith.constant 0 : index
    %236 = vector.load %arg10[%c0_81, %c0_82] : memref<1x32xf32, #tpu.memory_space<vmem>>, vector<1x32xf32>
    %237 = vector.broadcast %236 : vector<1x32xf32> to vector<16x32xf32>
    %238 = arith.addf %235, %237 : vector<16x32xf32>
    %239 = arith.addf %106, %238 : vector<16x32xf32>
    %c0_83 = arith.constant 0 : index
    %c0_84 = arith.constant 0 : index
    %240 = vector.load %arg12[%c0_83, %c0_84] : memref<16x32xf32, #tpu.memory_space<vmem>>, vector<16x32xf32>
    tpu.vector_store %arg12[%c0_83, %c0_84], %239 {strides = array<i32>} : memref<16x32xf32, #tpu.memory_space<vmem>>, vector<16x32xf32>,
    return
  }
}

</mosaic_0001>

<llo_original>
// kernel: transformer_block.1
$region0: #{transformer_block.1}
  #allocation0 [shape = 'u32[]', space=smem, size = 0x4, offset = 0x4, fixed_abs, tag = 'smem constant byte address 0x4 - core index']
  #allocation1 [shape = 'u32[144,128]{1,0:T(1,128)}', space=vmem, size = 0x12000, scoped, tag = 'internal scratch']
  %s0 = inlined_call_operand.vmem [shape: f32[16,32], index: 0, kind: input, shape index: {}]
  %s1 = inlined_call_operand.vmem [shape: f32[1,32], index: 1, kind: input, shape index: {}]
  %s2 = inlined_call_operand.vmem [shape: f32[1,32], index: 2, kind: input, shape index: {}]
  %s3 = inlined_call_operand.vmem [shape: f32[1,32], index: 3, kind: input, shape index: {}]
  %s4 = inlined_call_operand.vmem [shape: f32[1,32], index: 4, kind: input, shape index: {}]
  %s5 = inlined_call_operand.vmem [shape: bf16[32,96], index: 5, kind: input, shape index: {}]
  %s6 = inlined_call_operand.vmem [shape: bf16[32,32], index: 6, kind: input, shape index: {}]
  %s7 = inlined_call_operand.vmem [shape: bf16[32,128], index: 7, kind: input, shape index: {}]
  %s8 = inlined_call_operand.vmem [shape: bf16[128,32], index: 8, kind: input, shape index: {}]
  %s9 = inlined_call_operand.vmem [shape: f32[1,128], index: 9, kind: input, shape index: {}]
  %s10 = inlined_call_operand.vmem [shape: f32[1,32], index: 10, kind: input, shape index: {}]
  %s11 = inlined_call_operand.vmem [shape: f32[4], index: 11, kind: input, shape index: {}]
  %s12 = inlined_call_operand.hbm [shape: f32[16,32], index: 12, kind: output, shape index: {}]
  %s13 = sld [smem:[#allocation0]]
  $region62: #{transformer_block.1} parent=0
    _
  %s15 = ssub.s32 1, %s13
  %s16 = scalar_select 0, %s15, %s13
  $region1: #{transformer_block.1} parent=0
    #allocation2 [shape = 'u8[512]{0}', space=smem, size = 0x200, scoped, tag = 'input window, operand 11, single buffered']
    #allocation3 [shape = 's32[1]{0}', space=sflag, size = 0x4, scoped, tag = 'scoped memory for transformer_block.1']
    #allocation4 [shape = 's32[1]{0}', space=sflag, size = 0x4, scoped, tag = 'scoped memory for transformer_block.1']
    #allocation5 [shape = 'u8[8192]{0}', space=vmem, size = 0x2000, scoped, tag = 'output window, operand 0, single buffered']
    %17 = vsyncpa [#allocation4], 0
    %18 = vsyncpa [#allocation3], 0
    // Predicated region
    $region2: #{transformer_block.1} parent=1 // pred_check
      _
    $region3: #{transformer_block.1} parent=1 // pred_check_branch
      %20 = sbr.rel (0) target = $region5
    $region4: #{transformer_block.1} parent=1 // pred_region
      _
    $region5: #{transformer_block.1} parent=1 // pred_fallthru
      _
    // Predicated region
    $region6: #{transformer_block.1} parent=1 // pred_check
      _
    $region7: #{transformer_block.1} parent=1 // pred_check_branch
      %22 = sbr.rel (0) target = $region9
    $region8: #{transformer_block.1} parent=1 // pred_region
      _
    $region9: #{transformer_block.1} parent=1 // pred_fallthru
      _
    // Predicated region
    $region10: #{transformer_block.1} parent=1 // pred_check
      _
    $region11: #{transformer_block.1} parent=1 // pred_check_branch
      %24 = sbr.rel (0) target = $region13
    $region12: #{transformer_block.1} parent=1 // pred_region
      _
    $region13: #{transformer_block.1} parent=1 // pred_fallthru
      _
    // Predicated region
    $region14: #{transformer_block.1} parent=1 // pred_check
      _
    $region15: #{transformer_block.1} parent=1 // pred_check_branch
      %26 = sbr.rel (0) target = $region17
    $region16: #{transformer_block.1} parent=1 // pred_region
      _
    $region17: #{transformer_block.1} parent=1 // pred_fallthru
      _
    // Predicated region
    $region18: #{transformer_block.1} parent=1 // pred_check
      _
    $region19: #{transformer_block.1} parent=1 // pred_check_branch
      %28 = sbr.rel (0) target = $region21
    $region20: #{transformer_block.1} parent=1 // pred_region
      _
    $region21: #{transformer_block.1} parent=1 // pred_fallthru
      _
    // Predicated region
    $region22: #{transformer_block.1} parent=1 // pred_check
      _
    $region23: #{transformer_block.1} parent=1 // pred_check_branch
      %30 = sbr.rel (0) target = $region25
    $region24: #{transformer_block.1} parent=1 // pred_region
      _
    $region25: #{transformer_block.1} parent=1 // pred_fallthru
      _
    // Predicated region
    $region26: #{transformer_block.1} parent=1 // pred_check
      _
    $region27: #{transformer_block.1} parent=1 // pred_check_branch
      %32 = sbr.rel (0) target = $region29
    $region28: #{transformer_block.1} parent=1 // pred_region
      _
    $region29: #{transformer_block.1} parent=1 // pred_fallthru
      _
    // Predicated region
    $region30: #{transformer_block.1} parent=1 // pred_check
      _
    $region31: #{transformer_block.1} parent=1 // pred_check_branch
      %34 = sbr.rel (0) target = $region33
    $region32: #{transformer_block.1} parent=1 // pred_region
      _
    $region33: #{transformer_block.1} parent=1 // pred_fallthru
      _
    // Predicated region
    $region34: #{transformer_block.1} parent=1 // pred_check
      _
    $region35: #{transformer_block.1} parent=1 // pred_check_branch
      %36 = sbr.rel (0) target = $region37
    $region36: #{transformer_block.1} parent=1 // pred_region
      _
    $region37: #{transformer_block.1} parent=1 // pred_fallthru
      _
    // Predicated region
    $region38: #{transformer_block.1} parent=1 // pred_check
      _
    $region39: #{transformer_block.1} parent=1 // pred_check_branch
      %38 = sbr.rel (0) target = $region41
    $region40: #{transformer_block.1} parent=1 // pred_region
      _
    $region41: #{transformer_block.1} parent=1 // pred_fallthru
      _
    // Predicated region
    $region42: #{transformer_block.1} parent=1 // pred_check
      _
    $region43: #{transformer_block.1} parent=1 // pred_check_branch
      %40 = sbr.rel (0) target = $region45
    $region44: #{transformer_block.1} parent=1 // pred_region
      _
    $region45: #{transformer_block.1} parent=1 // pred_fallthru
      _
    // Predicated region
    $region46: #{transformer_block.1} parent=1 // pred_check
      _
    $region47: #{transformer_block.1} parent=1 // pred_check_branch
      %42 = sbr.rel (0) target = $region49
    $region48: #{transformer_block.1} parent=1 // pred_region
      %s44 = ssub.s32 16, 16
      %45 = vsyncadd [#allocation4], %s44
      %s47 = sshll.u32 %s11, 4
      %s48 = int_to_ptr.vmem [resolvable:$true] %s47
      %50 = dma.vmem_to_smem %s48, 16, [#allocation2], [#allocation4]
    $region49: #{transformer_block.1} parent=1 // pred_fallthru
      _
    // Predicated region
    $region50: #{transformer_block.1} parent=1 // pred_check
      _
    $region51: #{transformer_block.1} parent=1 // pred_check_branch
      %52 = sbr.rel (0) target = $region53
    $region52: #{transformer_block.1} parent=1 // pred_region
      %53 = dma.done [#allocation4], 16
    $region53: #{transformer_block.1} parent=1 // pred_fallthru
      _
    %54 = sfence
    %v56 = vld [vmem:[%s0] sm:$0xff]
    %v57 = vld [vmem:[%s0 + $0x8] sm:$0xff]
    %s58 = sld [smem:[#allocation2]]
    %s59 = sld [smem:[#allocation2 + $0x1]]
    %s60 = sld [smem:[#allocation2 + $0x2]]
    %s61 = sld [smem:[#allocation2 + $0x3]]
    %v62 = vld [vmem:[%s1] sm:$0x1]
    %v63 = vld [vmem:[%s2] sm:$0x1]
    %vm64 = vcmask 261120
    %v65 = vsel %vm64, %v56, 0.0
    %66 = vadd.xlane.f32.xlu0 %v65
    %v67 = vpop.xlane.xlu0 %66
    %v68 = vsel %vm64, %v57, 0.0
    %69 = vadd.xlane.f32.xlu0 %v68
    %v70 = vpop.xlane.xlu0 %69
    %v71 = vrcp.pop 32.0
    %v72 = vmul.f32 %v67, %v71
    %v73 = vmul.f32 %v70, %v71
    %v74 = vsub.f32 %v56, %v72
    %v75 = vsub.f32 %v57, %v73
    %v76 = vmul.f32 %v74, %v74
    %v77 = vmul.f32 %v75, %v75
    %v78 = vsel %vm64, %v76, 0.0
    %79 = vadd.xlane.f32.xlu0 %v78
    %v80 = vpop.xlane.xlu0 %79
    %v81 = vsel %vm64, %v77, 0.0
    %82 = vadd.xlane.f32.xlu0 %v81
    %v83 = vpop.xlane.xlu0 %82
    %v84 = vmul.f32 %v80, %v71
    %v85 = vmul.f32 %v83, %v71
    %v86 = vadd.f32 %v84, 1e-05
    %v87 = vadd.f32 %v85, 1e-05
    %v88 = vrsqrt.pop %v86
    %v89 = vrsqrt.pop %v87
    %v90 = vmul.f32 %v74, %v88
    %v91 = vmul.f32 %v75, %v89
    %v93 = vlaneseq
    %v94 = vshrl.u32 %v93, 7
    %v95 = vsub.s32 0, %v94
    %v96 = vrot.slane %v62, %v95
    %v98 = vmul.f32 %v90, %v96
    %v99 = vmul.f32 %v91, %v96
    %v101 = vlaneseq
    %v102 = vshrl.u32 %v101, 7
    %v103 = vsub.s32 0, %v102
    %v104 = vrot.slane %v63, %v103
    %v106 = vadd.f32 %v98, %v104
    %v107 = vadd.f32 %v99, %v104
    %v108 = vand.u32 2147483647, %v106
    %v109 = vand.u32 2147483647, %v107
    %v110 = vsel %vm64, %v108, -inf
    %111 = vmax.xlane.f32.xlu0 %v110
    %v112 = vpop.xlane.xlu0 %111
    %v113 = vsel %vm64, %v109, -inf
    %114 = vmax.xlane.f32.xlu0 %v113
    %v115 = vpop.xlane.xlu0 %114
    %v116 = vmax.f32 %v112, 1e-12
    %v117 = vmax.f32 %v115, 1e-12
    %v118 = vrcp.pop %v116
    %v119 = vrcp.pop %v117
    %v120 = vmul.f32 %v118, 127.0
    %v121 = vmul.f32 %v119, 127.0
    %v122 = vmul.f32 %v106, %v120
    %v123 = vmul.f32 %v107, %v121
    %v124 = vround.ne.pseudo %v122
    %v125 = vround.ne.pseudo %v123
    %v126 = vmax.f32 %v124, -127.0
    %v127 = vmax.f32 %v125, -127.0
    %v128 = vmin.f32 %v126, 127.0
    %v129 = vmin.f32 %v127, 127.0
    %v130 = vpack.c.bf16 %v129, %v128
    %v131 = vmul.f32 %v116, 0.007874016
    %v132 = vmul.f32 %v117, 0.007874016
    %v133 = vld [vmem:[%s5] sm:$0xf]
    %v134 = vld [vmem:[%s5 + $0x4] sm:$0xf]
    %v135 = vld [vmem:[%s5 + $0x8] sm:$0xf]
    %v136 = vld [vmem:[%s5 + $0xc] sm:$0xf]
    %v141 = vunpack.c.l.b16 %v133
    %v142 = vunpack.c.l.b16 %v134
    %v143 = vunpack.c.l.b16 %v135
    %v144 = vunpack.c.l.b16 %v136
    %v145 = vpack.c.b16 %v142, %v141
    %v146 = vpack.c.b16 %v144, %v143
    %v150 = vsel %vm64, %v130, 0
    %152 = vmatprep.subr.bf16.mxu0 0
    %153 = vmatpush1.bf16.msra.mxu0 %v145
    %154 = vmatprep.subr.bf16.mxu0 0
    %155 = vmatpush1.bf16.msra.mxu0 %v146
    %156 = vmatprep.subr.bf16.mxu0 0
    %157 = vmatpush1.bf16.msra.mxu0 0
    %158 = vmatprep.subr.bf16.mxu0 0
    %159 = vmatpush1.bf16.msra.mxu0 0
    %160 = vmatprep.subr.bf16.mxu0 0
    %161 = vmatpush1.bf16.msra.mxu0 0
    %162 = vmatprep.subr.bf16.mxu0 0
    %163 = vmatpush1.bf16.msra.mxu0 0
    %164 = vmatprep.subr.bf16.mxu0 0
    %165 = vmatpush1.bf16.msra.mxu0 0
    %166 = vmatprep.subr.bf16.mxu0 0
    %167 = vmatpush1.bf16.msra.mxu0 0
    %168 = vmatprep.subr.bf16.mxu0 0
    %169 = vmatpush1.bf16.msra.mxu0 0
    %170 = vmatprep.subr.bf16.mxu0 0
    %171 = vmatpush1.bf16.msra.mxu0 0
    %172 = vmatprep.subr.bf16.mxu0 0
    %173 = vmatpush1.bf16.msra.mxu0 0
    %174 = vmatprep.subr.bf16.mxu0 0
    %175 = vmatpush1.bf16.msra.mxu0 0
    %176 = vmatprep.subr.bf16.mxu0 0
    %177 = vmatpush1.bf16.msra.mxu0 0
    %178 = vmatprep.subr.bf16.mxu0 0
    %179 = vmatpush1.bf16.msra.mxu0 0
    %180 = vmatprep.subr.bf16.mxu0 0
    %181 = vmatpush1.bf16.msra.mxu0 0
    %182 = vmatprep.subr.bf16.mxu0 0
    %183 = vmatpush1.bf16.msra.mxu0 0
    %184 = vmatprep.mubr.bf16.mxu0 0
    %185 = vmatmul.mubr.bf16.gmra.mrb[0].mxu0 %v150
    %v186 = vpop.f32.mrb[0].mxu0
    %v187 = vadd.f32 0.0, %v186
    %v188 = vpop.f32.mrb[0].mxu0
    %v189 = vpop.f32.mrb[0].mxu0
    %v190 = vadd.f32 0.0, %v189
    %v191 = vpop.f32.mrb[0].mxu0
    %192 = vdwg.mxu0
    %v193 = vstv %s58
    %v194 = vmul.f32 %v131, %v193
    %v195 = vmul.f32 %v132, %v193
    %v196 = vmul.f32 %v187, %v194
    %v197 = vmul.f32 %v190, %v195
    %200 = vrot.lane.b32.xlu0 %v196, 120
    %v201 = vpop.permute.xlu0 %200
    %202 = vrot.lane.b32.xlu0 %v197, 120
    %v203 = vpop.permute.xlu0 %202
    %206 = vrot.lane.b32.xlu0 %v196, 112
    %v207 = vpop.permute.xlu0 %206
    %208 = vrot.lane.b32.xlu0 %v197, 112
    %v209 = vpop.permute.xlu0 %208
    %212 = vrot.lane.b32.xlu0 %v196, 104
    %v213 = vpop.permute.xlu0 %212
    %214 = vrot.lane.b32.xlu0 %v197, 104
    %v215 = vpop.permute.xlu0 %214
    %218 = vrot.lane.b32.xlu0 %v196, 96
    %v219 = vpop.permute.xlu0 %218
    %220 = vrot.lane.b32.xlu0 %v197, 96
    %v221 = vpop.permute.xlu0 %220
    %224 = vrot.lane.b32.xlu0 %v196, 88
    %v225 = vpop.permute.xlu0 %224
    %226 = vrot.lane.b32.xlu0 %v197, 88
    %v227 = vpop.permute.xlu0 %226
    %230 = vrot.lane.b32.xlu0 %v196, 80
    %v231 = vpop.permute.xlu0 %230
    %232 = vrot.lane.b32.xlu0 %v197, 80
    %v233 = vpop.permute.xlu0 %232
    %236 = vrot.lane.b32.xlu0 %v196, 72
    %v237 = vpop.permute.xlu0 %236
    %238 = vrot.lane.b32.xlu0 %v197, 72
    %v239 = vpop.permute.xlu0 %238
    %242 = vrot.lane.b32.xlu0 %v196, 64
    %v243 = vpop.permute.xlu0 %242
    %244 = vrot.lane.b32.xlu0 %v197, 64
    %v245 = vpop.permute.xlu0 %244
    %248 = vrot.lane.b32.xlu0 %v196, 56
    %v249 = vpop.permute.xlu0 %248
    %250 = vrot.lane.b32.xlu0 %v197, 56
    %v251 = vpop.permute.xlu0 %250
    %254 = vrot.lane.b32.xlu0 %v196, 48
    %v255 = vpop.permute.xlu0 %254
    %256 = vrot.lane.b32.xlu0 %v197, 48
    %v257 = vpop.permute.xlu0 %256
    %260 = vrot.lane.b32.xlu0 %v196, 40
    %v261 = vpop.permute.xlu0 %260
    %262 = vrot.lane.b32.xlu0 %v197, 40
    %v263 = vpop.permute.xlu0 %262
    %v266 = vcombine.low %v196, %v207
    %v267 = vcombine.high %v196, %v207
    %v269 = vunpack.c.l.s4 1983009808
    %v270 = vunpack.c.0.s8 %v269
    %v271 = vlaneseq
    %v272 = vshrl.u32 %v271, 7
    %v273 = vsub.s32 %v270, %v272
    %v274 = vrot.slane %v266, %v273
    %v276 = vunpack.c.l.s4 1983009808
    %v277 = vunpack.c.0.s8 %v276
    %v278 = vlaneseq
    %v279 = vshrl.u32 %v278, 7
    %v280 = vsub.s32 %v277, %v279
    %v281 = vrot.slane %v267, %v280
    %v282 = vcombine.low %v201, %v213
    %v283 = vcombine.high %v201, %v213
    %v285 = vunpack.c.l.s4 1983009808
    %v286 = vunpack.c.0.s8 %v285
    %v287 = vlaneseq
    %v288 = vshrl.u32 %v287, 7
    %v289 = vsub.s32 %v286, %v288
    %v290 = vrot.slane %v282, %v289
    %v292 = vunpack.c.l.s4 1983009808
    %v293 = vunpack.c.0.s8 %v292
    %v294 = vlaneseq
    %v295 = vshrl.u32 %v294, 7
    %v296 = vsub.s32 %v293, %v295
    %v297 = vrot.slane %v283, %v296
    %v298 = vcombine.low %v219, %v231
    %v299 = vcombine.high %v219, %v231
    %v301 = vunpack.c.l.s4 1983009808
    %v302 = vunpack.c.0.s8 %v301
    %v303 = vlaneseq
    %v304 = vshrl.u32 %v303, 7
    %v305 = vsub.s32 %v302, %v304
    %v306 = vrot.slane %v298, %v305
    %v308 = vunpack.c.l.s4 1983009808
    %v309 = vunpack.c.0.s8 %v308
    %v310 = vlaneseq
    %v311 = vshrl.u32 %v310, 7
    %v312 = vsub.s32 %v309, %v311
    %v313 = vrot.slane %v299, %v312
    %v314 = vcombine.low %v225, %v237
    %v315 = vcombine.high %v225, %v237
    %v317 = vunpack.c.l.s4 1983009808
    %v318 = vunpack.c.0.s8 %v317
    %v319 = vlaneseq
    %v320 = vshrl.u32 %v319, 7
    %v321 = vsub.s32 %v318, %v320
    %v322 = vrot.slane %v314, %v321
    %v324 = vunpack.c.l.s4 1983009808
    %v325 = vunpack.c.0.s8 %v324
    %v326 = vlaneseq
    %v327 = vshrl.u32 %v326, 7
    %v328 = vsub.s32 %v325, %v327
    %v329 = vrot.slane %v315, %v328
    %v330 = vcombine.low %v274, %v290
    %v331 = vcombine.high %v274, %v290
    %v333 = vunpack.c.l.s4 1934713408
    %v334 = vunpack.c.0.s8 %v333
    %v335 = vlaneseq
    %v336 = vshrl.u32 %v335, 7
    %v337 = vsub.s32 %v334, %v336
    %v338 = vrot.slane %v330, %v337
    %v340 = vunpack.c.l.s4 1934713408
    %v341 = vunpack.c.0.s8 %v340
    %v342 = vlaneseq
    %v343 = vshrl.u32 %v342, 7
    %v344 = vsub.s32 %v341, %v343
    %v345 = vrot.slane %v331, %v344
    %v346 = vcombine.low %v281, %v297
    %v347 = vcombine.high %v281, %v297
    %v349 = vunpack.c.l.s4 1934713408
    %v350 = vunpack.c.0.s8 %v349
    %v351 = vlaneseq
    %v352 = vshrl.u32 %v351, 7
    %v353 = vsub.s32 %v350, %v352
    %v354 = vrot.slane %v346, %v353
    %v356 = vunpack.c.l.s4 1934713408
    %v357 = vunpack.c.0.s8 %v356
    %v358 = vlaneseq
    %v359 = vshrl.u32 %v358, 7
    %v360 = vsub.s32 %v357, %v359
    %v361 = vrot.slane %v347, %v360
    %v362 = vcombine.low %v306, %v322
    %v363 = vcombine.high %v306, %v322
    %v365 = vunpack.c.l.s4 1934713408
    %v366 = vunpack.c.0.s8 %v365
    %v367 = vlaneseq
    %v368 = vshrl.u32 %v367, 7
    %v369 = vsub.s32 %v366, %v368
    %v370 = vrot.slane %v362, %v369
    %v372 = vunpack.c.l.s4 1934713408
    %v373 = vunpack.c.0.s8 %v372
    %v374 = vlaneseq
    %v375 = vshrl.u32 %v374, 7
    %v376 = vsub.s32 %v373, %v375
    %v377 = vrot.slane %v363, %v376
    %v378 = vcombine.low %v313, %v329
    %v379 = vcombine.high %v313, %v329
    %v381 = vunpack.c.l.s4 1934713408
    %v382 = vunpack.c.0.s8 %v381
    %v383 = vlaneseq
    %v384 = vshrl.u32 %v383, 7
    %v385 = vsub.s32 %v382, %v384
    %v386 = vrot.slane %v378, %v385
    %v388 = vunpack.c.l.s4 1934713408
    %v389 = vunpack.c.0.s8 %v388
    %v390 = vlaneseq
    %v391 = vshrl.u32 %v390, 7
    %v392 = vsub.s32 %v389, %v391
    %v393 = vrot.slane %v379, %v392
    %v394 = vcombine.low %v338, %v370
    %v395 = vcombine.high %v338, %v370
    %v396 = vcombine.low %v345, %v377
    %v397 = vcombine.high %v345, %v377
    %v398 = vcombine.low %v354, %v386
    %v399 = vcombine.high %v354, %v386
    %v400 = vcombine.low %v361, %v393
    %v401 = vcombine.high %v361, %v393
    %v402 = vcombine.low %v243, %v255
    %v403 = vcombine.high %v243, %v255
    %v405 = vunpack.c.l.s4 1983009808
    %v406 = vunpack.c.0.s8 %v405
    %v407 = vlaneseq
    %v408 = vshrl.u32 %v407, 7
    %v409 = vsub.s32 %v406, %v408
    %v410 = vrot.slane %v402, %v409
    %v412 = vunpack.c.l.s4 1983009808
    %v413 = vunpack.c.0.s8 %v412
    %v414 = vlaneseq
    %v415 = vshrl.u32 %v414, 7
    %v416 = vsub.s32 %v413, %v415
    %v417 = vrot.slane %v403, %v416
    %v418 = vcombine.low %v249, %v261
    %v419 = vcombine.high %v249, %v261
    %v421 = vunpack.c.l.s4 1983009808
    %v422 = vunpack.c.0.s8 %v421
    %v423 = vlaneseq
    %v424 = vshrl.u32 %v423, 7
    %v425 = vsub.s32 %v422, %v424
    %v426 = vrot.slane %v418, %v425
    %v428 = vunpack.c.l.s4 1983009808
    %v429 = vunpack.c.0.s8 %v428
    %v430 = vlaneseq
    %v431 = vshrl.u32 %v430, 7
    %v432 = vsub.s32 %v429, %v431
    %v433 = vrot.slane %v419, %v432
    %v434 = vcombine.low %v410, %v426
    %v435 = vcombine.high %v410, %v426
    %v437 = vunpack.c.l.s4 1934713408
    %v438 = vunpack.c.0.s8 %v437
    %v439 = vlaneseq
    %v440 = vshrl.u32 %v439, 7
    %v441 = vsub.s32 %v438, %v440
    %v442 = vrot.slane %v434, %v441
    %v444 = vunpack.c.l.s4 1934713408
    %v445 = vunpack.c.0.s8 %v444
    %v446 = vlaneseq
    %v447 = vshrl.u32 %v446, 7
    %v448 = vsub.s32 %v445, %v447
    %v449 = vrot.slane %v435, %v448
    %v450 = vcombine.low %v417, %v433
    %v451 = vcombine.high %v417, %v433
    %v453 = vunpack.c.l.s4 1934713408
    %v454 = vunpack.c.0.s8 %v453
    %v455 = vlaneseq
    %v456 = vshrl.u32 %v455, 7
    %v457 = vsub.s32 %v454, %v456
    %v458 = vrot.slane %v450, %v457
    %v460 = vunpack.c.l.s4 1934713408
    %v461 = vunpack.c.0.s8 %v460
    %v462 = vlaneseq
    %v463 = vshrl.u32 %v462, 7
    %v464 = vsub.s32 %v461, %v463
    %v465 = vrot.slane %v451, %v464
    %v466 = vcombine.high %v442, 0.0
    %v467 = vcombine.high %v449, 0.0
    %v468 = vcombine.high %v458, 0.0
    %v469 = vcombine.high %v465, 0.0
    %v470 = vcombine.low %v197, %v209
    %v471 = vcombine.high %v197, %v209
    %v473 = vunpack.c.l.s4 1983009808
    %v474 = vunpack.c.0.s8 %v473
    %v475 = vlaneseq
    %v476 = vshrl.u32 %v475, 7
    %v477 = vsub.s32 %v474, %v476
    %v478 = vrot.slane %v470, %v477
    %v480 = vunpack.c.l.s4 1983009808
    %v481 = vunpack.c.0.s8 %v480
    %v482 = vlaneseq
    %v483 = vshrl.u32 %v482, 7
    %v484 = vsub.s32 %v481, %v483
    %v485 = vrot.slane %v471, %v484
    %v486 = vcombine.low %v203, %v215
    %v487 = vcombine.high %v203, %v215
    %v489 = vunpack.c.l.s4 1983009808
    %v490 = vunpack.c.0.s8 %v489
    %v491 = vlaneseq
    %v492 = vshrl.u32 %v491, 7
    %v493 = vsub.s32 %v490, %v492
    %v494 = vrot.slane %v486, %v493
    %v496 = vunpack.c.l.s4 1983009808
    %v497 = vunpack.c.0.s8 %v496
    %v498 = vlaneseq
    %v499 = vshrl.u32 %v498, 7
    %v500 = vsub.s32 %v497, %v499
    %v501 = vrot.slane %v487, %v500
    %v502 = vcombine.low %v221, %v233
    %v503 = vcombine.high %v221, %v233
    %v505 = vunpack.c.l.s4 1983009808
    %v506 = vunpack.c.0.s8 %v505
    %v507 = vlaneseq
    %v508 = vshrl.u32 %v507, 7
    %v509 = vsub.s32 %v506, %v508
    %v510 = vrot.slane %v502, %v509
    %v512 = vunpack.c.l.s4 1983009808
    %v513 = vunpack.c.0.s8 %v512
    %v514 = vlaneseq
    %v515 = vshrl.u32 %v514, 7
    %v516 = vsub.s32 %v513, %v515
    %v517 = vrot.slane %v503, %v516
    %v518 = vcombine.low %v227, %v239
    %v519 = vcombine.high %v227, %v239
    %v521 = vunpack.c.l.s4 1983009808
    %v522 = vunpack.c.0.s8 %v521
    %v523 = vlaneseq
    %v524 = vshrl.u32 %v523, 7
    %v525 = vsub.s32 %v522, %v524
    %v526 = vrot.slane %v518, %v525
    %v528 = vunpack.c.l.s4 1983009808
    %v529 = vunpack.c.0.s8 %v528
    %v530 = vlaneseq
    %v531 = vshrl.u32 %v530, 7
    %v532 = vsub.s32 %v529, %v531
    %v533 = vrot.slane %v519, %v532
    %v534 = vcombine.low %v478, %v494
    %v535 = vcombine.high %v478, %v494
    %v537 = vunpack.c.l.s4 1934713408
    %v538 = vunpack.c.0.s8 %v537
    %v539 = vlaneseq
    %v540 = vshrl.u32 %v539, 7
    %v541 = vsub.s32 %v538, %v540
    %v542 = vrot.slane %v534, %v541
    %v544 = vunpack.c.l.s4 1934713408
    %v545 = vunpack.c.0.s8 %v544
    %v546 = vlaneseq
    %v547 = vshrl.u32 %v546, 7
    %v548 = vsub.s32 %v545, %v547
    %v549 = vrot.slane %v535, %v548
    %v550 = vcombine.low %v485, %v501
    %v551 = vcombine.high %v485, %v501
    %v553 = vunpack.c.l.s4 1934713408
    %v554 = vunpack.c.0.s8 %v553
    %v555 = vlaneseq
    %v556 = vshrl.u32 %v555, 7
    %v557 = vsub.s32 %v554, %v556
    %v558 = vrot.slane %v550, %v557
    %v560 = vunpack.c.l.s4 1934713408
    %v561 = vunpack.c.0.s8 %v560
    %v562 = vlaneseq
    %v563 = vshrl.u32 %v562, 7
    %v564 = vsub.s32 %v561, %v563
    %v565 = vrot.slane %v551, %v564
    %v566 = vcombine.low %v510, %v526
    %v567 = vcombine.high %v510, %v526
    %v569 = vunpack.c.l.s4 1934713408
    %v570 = vunpack.c.0.s8 %v569
    %v571 = vlaneseq
    %v572 = vshrl.u32 %v571, 7
    %v573 = vsub.s32 %v570, %v572
    %v574 = vrot.slane %v566, %v573
    %v576 = vunpack.c.l.s4 1934713408
    %v577 = vunpack.c.0.s8 %v576
    %v578 = vlaneseq
    %v579 = vshrl.u32 %v578, 7
    %v580 = vsub.s32 %v577, %v579
    %v581 = vrot.slane %v567, %v580
    %v582 = vcombine.low %v517, %v533
    %v583 = vcombine.high %v517, %v533
    %v585 = vunpack.c.l.s4 1934713408
    %v586 = vunpack.c.0.s8 %v585
    %v587 = vlaneseq
    %v588 = vshrl.u32 %v587, 7
    %v589 = vsub.s32 %v586, %v588
    %v590 = vrot.slane %v582, %v589
    %v592 = vunpack.c.l.s4 1934713408
    %v593 = vunpack.c.0.s8 %v592
    %v594 = vlaneseq
    %v595 = vshrl.u32 %v594, 7
    %v596 = vsub.s32 %v593, %v595
    %v597 = vrot.slane %v583, %v596
    %v598 = vcombine.low %v542, %v574
    %v599 = vcombine.high %v542, %v574
    %v600 = vcombine.low %v549, %v581
    %v601 = vcombine.high %v549, %v581
    %v602 = vcombine.low %v558, %v590
    %v603 = vcombine.high %v558, %v590
    %v604 = vcombine.low %v565, %v597
    %v605 = vcombine.high %v565, %v597
    %v606 = vcombine.low %v245, %v257
    %v607 = vcombine.high %v245, %v257
    %v609 = vunpack.c.l.s4 1983009808
    %v610 = vunpack.c.0.s8 %v609
    %v611 = vlaneseq
    %v612 = vshrl.u32 %v611, 7
    %v613 = vsub.s32 %v610, %v612
    %v614 = vrot.slane %v606, %v613
    %v616 = vunpack.c.l.s4 1983009808
    %v617 = vunpack.c.0.s8 %v616
    %v618 = vlaneseq
    %v619 = vshrl.u32 %v618, 7
    %v620 = vsub.s32 %v617, %v619
    %v621 = vrot.slane %v607, %v620
    %v622 = vcombine.low %v251, %v263
    %v623 = vcombine.high %v251, %v263
    %v625 = vunpack.c.l.s4 1983009808
    %v626 = vunpack.c.0.s8 %v625
    %v627 = vlaneseq
    %v628 = vshrl.u32 %v627, 7
    %v629 = vsub.s32 %v626, %v628
    %v630 = vrot.slane %v622, %v629
    %v632 = vunpack.c.l.s4 1983009808
    %v633 = vunpack.c.0.s8 %v632
    %v634 = vlaneseq
    %v635 = vshrl.u32 %v634, 7
    %v636 = vsub.s32 %v633, %v635
    %v637 = vrot.slane %v623, %v636
    %v638 = vcombine.low %v614, %v630
    %v639 = vcombine.high %v614, %v630
    %v641 = vunpack.c.l.s4 1934713408
    %v642 = vunpack.c.0.s8 %v641
    %v643 = vlaneseq
    %v644 = vshrl.u32 %v643, 7
    %v645 = vsub.s32 %v642, %v644
    %v646 = vrot.slane %v638, %v645
    %v648 = vunpack.c.l.s4 1934713408
    %v649 = vunpack.c.0.s8 %v648
    %v650 = vlaneseq
    %v651 = vshrl.u32 %v650, 7
    %v652 = vsub.s32 %v649, %v651
    %v653 = vrot.slane %v639, %v652
    %v654 = vcombine.low %v621, %v637
    %v655 = vcombine.high %v621, %v637
    %v657 = vunpack.c.l.s4 1934713408
    %v658 = vunpack.c.0.s8 %v657
    %v659 = vlaneseq
    %v660 = vshrl.u32 %v659, 7
    %v661 = vsub.s32 %v658, %v660
    %v662 = vrot.slane %v654, %v661
    %v664 = vunpack.c.l.s4 1934713408
    %v665 = vunpack.c.0.s8 %v664
    %v666 = vlaneseq
    %v667 = vshrl.u32 %v666, 7
    %v668 = vsub.s32 %v665, %v667
    %v669 = vrot.slane %v655, %v668
    %v670 = vcombine.high %v646, 0.0
    %v671 = vcombine.high %v653, 0.0
    %v672 = vcombine.high %v662, 0.0
    %v673 = vcombine.high %v669, 0.0
    %v674 = vcombine.low %v394, %v396
    %v675 = vcombine.high %v394, %v396
    %v677 = vunpack.c.l.s4 1983009808
    %v678 = vunpack.c.0.s8 %v677
    %v679 = vlaneseq
    %v680 = vshrl.u32 %v679, 7
    %v681 = vsub.s32 %v678, %v680
    %v682 = vrot.slane %v674, %v681
    %v684 = vunpack.c.l.s4 1983009808
    %v685 = vunpack.c.0.s8 %v684
    %v686 = vlaneseq
    %v687 = vshrl.u32 %v686, 7
    %v688 = vsub.s32 %v685, %v687
    %v689 = vrot.slane %v675, %v688
    %v690 = vcombine.low %v395, %v397
    %v691 = vcombine.high %v395, %v397
    %v693 = vunpack.c.l.s4 1983009808
    %v694 = vunpack.c.0.s8 %v693
    %v695 = vlaneseq
    %v696 = vshrl.u32 %v695, 7
    %v697 = vsub.s32 %v694, %v696
    %v698 = vrot.slane %v690, %v697
    %v700 = vunpack.c.l.s4 1983009808
    %v701 = vunpack.c.0.s8 %v700
    %v702 = vlaneseq
    %v703 = vshrl.u32 %v702, 7
    %v704 = vsub.s32 %v701, %v703
    %v705 = vrot.slane %v691, %v704
    %v706 = vcombine.low %v398, %v400
    %v707 = vcombine.high %v398, %v400
    %v709 = vunpack.c.l.s4 1983009808
    %v710 = vunpack.c.0.s8 %v709
    %v711 = vlaneseq
    %v712 = vshrl.u32 %v711, 7
    %v713 = vsub.s32 %v710, %v712
    %v714 = vrot.slane %v706, %v713
    %v716 = vunpack.c.l.s4 1983009808
    %v717 = vunpack.c.0.s8 %v716
    %v718 = vlaneseq
    %v719 = vshrl.u32 %v718, 7
    %v720 = vsub.s32 %v717, %v719
    %v721 = vrot.slane %v707, %v720
    %v722 = vcombine.low %v399, %v401
    %v723 = vcombine.high %v399, %v401
    %v725 = vunpack.c.l.s4 1983009808
    %v726 = vunpack.c.0.s8 %v725
    %v727 = vlaneseq
    %v728 = vshrl.u32 %v727, 7
    %v729 = vsub.s32 %v726, %v728
    %v730 = vrot.slane %v722, %v729
    %v732 = vunpack.c.l.s4 1983009808
    %v733 = vunpack.c.0.s8 %v732
    %v734 = vlaneseq
    %v735 = vshrl.u32 %v734, 7
    %v736 = vsub.s32 %v733, %v735
    %v737 = vrot.slane %v723, %v736
    %v738 = vcombine.low %v682, %v698
    %v739 = vcombine.high %v682, %v698
    %v741 = vunpack.c.l.s4 1934713408
    %v742 = vunpack.c.0.s8 %v741
    %v743 = vlaneseq
    %v744 = vshrl.u32 %v743, 7
    %v745 = vsub.s32 %v742, %v744
    %v746 = vrot.slane %v738, %v745
    %v748 = vunpack.c.l.s4 1934713408
    %v749 = vunpack.c.0.s8 %v748
    %v750 = vlaneseq
    %v751 = vshrl.u32 %v750, 7
    %v752 = vsub.s32 %v749, %v751
    %v753 = vrot.slane %v739, %v752
    %v754 = vcombine.low %v689, %v705
    %v755 = vcombine.high %v689, %v705
    %v757 = vunpack.c.l.s4 1934713408
    %v758 = vunpack.c.0.s8 %v757
    %v759 = vlaneseq
    %v760 = vshrl.u32 %v759, 7
    %v761 = vsub.s32 %v758, %v760
    %v762 = vrot.slane %v754, %v761
    %v764 = vunpack.c.l.s4 1934713408
    %v765 = vunpack.c.0.s8 %v764
    %v766 = vlaneseq
    %v767 = vshrl.u32 %v766, 7
    %v768 = vsub.s32 %v765, %v767
    %v769 = vrot.slane %v755, %v768
    %v770 = vcombine.low %v714, %v730
    %v771 = vcombine.high %v714, %v730
    %v773 = vunpack.c.l.s4 1934713408
    %v774 = vunpack.c.0.s8 %v773
    %v775 = vlaneseq
    %v776 = vshrl.u32 %v775, 7
    %v777 = vsub.s32 %v774, %v776
    %v778 = vrot.slane %v770, %v777
    %v780 = vunpack.c.l.s4 1934713408
    %v781 = vunpack.c.0.s8 %v780
    %v782 = vlaneseq
    %v783 = vshrl.u32 %v782, 7
    %v784 = vsub.s32 %v781, %v783
    %v785 = vrot.slane %v771, %v784
    %v786 = vcombine.low %v721, %v737
    %v787 = vcombine.high %v721, %v737
    %v789 = vunpack.c.l.s4 1934713408
    %v790 = vunpack.c.0.s8 %v789
    %v791 = vlaneseq
    %v792 = vshrl.u32 %v791, 7
    %v793 = vsub.s32 %v790, %v792
    %v794 = vrot.slane %v786, %v793
    %v796 = vunpack.c.l.s4 1934713408
    %v797 = vunpack.c.0.s8 %v796
    %v798 = vlaneseq
    %v799 = vshrl.u32 %v798, 7
    %v800 = vsub.s32 %v797, %v799
    %v801 = vrot.slane %v787, %v800
    %v802 = vcombine.low %v746, %v778
    %v803 = vcombine.high %v746, %v778
    %v804 = vcombine.low %v753, %v785
    %v805 = vcombine.high %v753, %v785
    %v806 = vcombine.low %v762, %v794
    %v807 = vcombine.high %v762, %v794
    %v808 = vcombine.low %v769, %v801
    %v809 = vcombine.high %v769, %v801
    %v810 = vcombine.low %v598, %v600
    %v811 = vcombine.high %v598, %v600
    %v813 = vunpack.c.l.s4 1983009808
    %v814 = vunpack.c.0.s8 %v813
    %v815 = vlaneseq
    %v816 = vshrl.u32 %v815, 7
    %v817 = vsub.s32 %v814, %v816
    %v818 = vrot.slane %v810, %v817
    %v820 = vunpack.c.l.s4 1983009808
    %v821 = vunpack.c.0.s8 %v820
    %v822 = vlaneseq
    %v823 = vshrl.u32 %v822, 7
    %v824 = vsub.s32 %v821, %v823
    %v825 = vrot.slane %v811, %v824
    %v826 = vcombine.low %v599, %v601
    %v827 = vcombine.high %v599, %v601
    %v829 = vunpack.c.l.s4 1983009808
    %v830 = vunpack.c.0.s8 %v829
    %v831 = vlaneseq
    %v832 = vshrl.u32 %v831, 7
    %v833 = vsub.s32 %v830, %v832
    %v834 = vrot.slane %v826, %v833
    %v836 = vunpack.c.l.s4 1983009808
    %v837 = vunpack.c.0.s8 %v836
    %v838 = vlaneseq
    %v839 = vshrl.u32 %v838, 7
    %v840 = vsub.s32 %v837, %v839
    %v841 = vrot.slane %v827, %v840
    %v842 = vcombine.low %v602, %v604
    %v843 = vcombine.high %v602, %v604
    %v845 = vunpack.c.l.s4 1983009808
    %v846 = vunpack.c.0.s8 %v845
    %v847 = vlaneseq
    %v848 = vshrl.u32 %v847, 7
    %v849 = vsub.s32 %v846, %v848
    %v850 = vrot.slane %v842, %v849
    %v852 = vunpack.c.l.s4 1983009808
    %v853 = vunpack.c.0.s8 %v852
    %v854 = vlaneseq
    %v855 = vshrl.u32 %v854, 7
    %v856 = vsub.s32 %v853, %v855
    %v857 = vrot.slane %v843, %v856
    %v858 = vcombine.low %v603, %v605
    %v859 = vcombine.high %v603, %v605
    %v861 = vunpack.c.l.s4 1983009808
    %v862 = vunpack.c.0.s8 %v861
    %v863 = vlaneseq
    %v864 = vshrl.u32 %v863, 7
    %v865 = vsub.s32 %v862, %v864
    %v866 = vrot.slane %v858, %v865
    %v868 = vunpack.c.l.s4 1983009808
    %v869 = vunpack.c.0.s8 %v868
    %v870 = vlaneseq
    %v871 = vshrl.u32 %v870, 7
    %v872 = vsub.s32 %v869, %v871
    %v873 = vrot.slane %v859, %v872
    %v874 = vcombine.low %v818, %v834
    %v875 = vcombine.high %v818, %v834
    %v877 = vunpack.c.l.s4 1934713408
    %v878 = vunpack.c.0.s8 %v877
    %v879 = vlaneseq
    %v880 = vshrl.u32 %v879, 7
    %v881 = vsub.s32 %v878, %v880
    %v882 = vrot.slane %v874, %v881
    %v884 = vunpack.c.l.s4 1934713408
    %v885 = vunpack.c.0.s8 %v884
    %v886 = vlaneseq
    %v887 = vshrl.u32 %v886, 7
    %v888 = vsub.s32 %v885, %v887
    %v889 = vrot.slane %v875, %v888
    %v890 = vcombine.low %v825, %v841
    %v891 = vcombine.high %v825, %v841
    %v893 = vunpack.c.l.s4 1934713408
    %v894 = vunpack.c.0.s8 %v893
    %v895 = vlaneseq
    %v896 = vshrl.u32 %v895, 7
    %v897 = vsub.s32 %v894, %v896
    %v898 = vrot.slane %v890, %v897
    %v900 = vunpack.c.l.s4 1934713408
    %v901 = vunpack.c.0.s8 %v900
    %v902 = vlaneseq
    %v903 = vshrl.u32 %v902, 7
    %v904 = vsub.s32 %v901, %v903
    %v905 = vrot.slane %v891, %v904
    %v906 = vcombine.low %v850, %v866
    %v907 = vcombine.high %v850, %v866
    %v909 = vunpack.c.l.s4 1934713408
    %v910 = vunpack.c.0.s8 %v909
    %v911 = vlaneseq
    %v912 = vshrl.u32 %v911, 7
    %v913 = vsub.s32 %v910, %v912
    %v914 = vrot.slane %v906, %v913
    %v916 = vunpack.c.l.s4 1934713408
    %v917 = vunpack.c.0.s8 %v916
    %v918 = vlaneseq
    %v919 = vshrl.u32 %v918, 7
    %v920 = vsub.s32 %v917, %v919
    %v921 = vrot.slane %v907, %v920
    %v922 = vcombine.low %v857, %v873
    %v923 = vcombine.high %v857, %v873
    %v925 = vunpack.c.l.s4 1934713408
    %v926 = vunpack.c.0.s8 %v925
    %v927 = vlaneseq
    %v928 = vshrl.u32 %v927, 7
    %v929 = vsub.s32 %v926, %v928
    %v930 = vrot.slane %v922, %v929
    %v932 = vunpack.c.l.s4 1934713408
    %v933 = vunpack.c.0.s8 %v932
    %v934 = vlaneseq
    %v935 = vshrl.u32 %v934, 7
    %v936 = vsub.s32 %v933, %v935
    %v937 = vrot.slane %v923, %v936
    %v938 = vcombine.low %v882, %v914
    %v939 = vcombine.high %v882, %v914
    %v940 = vcombine.low %v889, %v921
    %v941 = vcombine.high %v889, %v921
    %v942 = vcombine.low %v898, %v930
    %v943 = vcombine.high %v898, %v930
    %v944 = vcombine.low %v905, %v937
    %v945 = vcombine.high %v905, %v937
    %v946 = vcombine.low %v442, %v449
    %v948 = vunpack.c.l.s4 1983009808
    %v949 = vunpack.c.0.s8 %v948
    %v950 = vlaneseq
    %v951 = vshrl.u32 %v950, 7
    %v952 = vsub.s32 %v949, %v951
    %v953 = vrot.slane %v946, %v952
    %v954 = vcombine.low %v466, %v467
    %v956 = vunpack.c.l.s4 1983009808
    %v957 = vunpack.c.0.s8 %v956
    %v958 = vlaneseq
    %v959 = vshrl.u32 %v958, 7
    %v960 = vsub.s32 %v957, %v959
    %v961 = vrot.slane %v954, %v960
    %v962 = vcombine.low %v458, %v465
    %v964 = vunpack.c.l.s4 1983009808
    %v965 = vunpack.c.0.s8 %v964
    %v966 = vlaneseq
    %v967 = vshrl.u32 %v966, 7
    %v968 = vsub.s32 %v965, %v967
    %v969 = vrot.slane %v962, %v968
    %v970 = vcombine.low %v468, %v469
    %v972 = vunpack.c.l.s4 1983009808
    %v973 = vunpack.c.0.s8 %v972
    %v974 = vlaneseq
    %v975 = vshrl.u32 %v974, 7
    %v976 = vsub.s32 %v973, %v975
    %v977 = vrot.slane %v970, %v976
    %v978 = vcombine.low %v953, %v961
    %v979 = vcombine.high %v953, %v961
    %v981 = vunpack.c.l.s4 1934713408
    %v982 = vunpack.c.0.s8 %v981
    %v983 = vlaneseq
    %v984 = vshrl.u32 %v983, 7
    %v985 = vsub.s32 %v982, %v984
    %v986 = vrot.slane %v978, %v985
    %v988 = vunpack.c.l.s4 1934713408
    %v989 = vunpack.c.0.s8 %v988
    %v990 = vlaneseq
    %v991 = vshrl.u32 %v990, 7
    %v992 = vsub.s32 %v989, %v991
    %v993 = vrot.slane %v979, %v992
    %v994 = vcombine.low %v969, %v977
    %v995 = vcombine.high %v969, %v977
    %v997 = vunpack.c.l.s4 1934713408
    %v998 = vunpack.c.0.s8 %v997
    %v999 = vlaneseq
    %v1000 = vshrl.u32 %v999, 7
    %v1001 = vsub.s32 %v998, %v1000
    %v1002 = vrot.slane %v994, %v1001
    %v1004 = vunpack.c.l.s4 1934713408
    %v1005 = vunpack.c.0.s8 %v1004
    %v1006 = vlaneseq
    %v1007 = vshrl.u32 %v1006, 7
    %v1008 = vsub.s32 %v1005, %v1007
    %v1009 = vrot.slane %v995, %v1008
    %v1010 = vcombine.low %v986, %v1002
    %v1011 = vcombine.high %v986, %v1002
    %v1012 = vcombine.low %v993, %v1009
    %v1013 = vcombine.high %v993, %v1009
    %v1014 = vcombine.low %v646, %v653
    %v1016 = vunpack.c.l.s4 1983009808
    %v1017 = vunpack.c.0.s8 %v1016
    %v1018 = vlaneseq
    %v1019 = vshrl.u32 %v1018, 7
    %v1020 = vsub.s32 %v1017, %v1019
    %v1021 = vrot.slane %v1014, %v1020
    %v1022 = vcombine.low %v670, %v671
    %v1024 = vunpack.c.l.s4 1983009808
    %v1025 = vunpack.c.0.s8 %v1024
    %v1026 = vlaneseq
    %v1027 = vshrl.u32 %v1026, 7
    %v1028 = vsub.s32 %v1025, %v1027
    %v1029 = vrot.slane %v1022, %v1028
    %v1030 = vcombine.low %v662, %v669
    %v1032 = vunpack.c.l.s4 1983009808
    %v1033 = vunpack.c.0.s8 %v1032
    %v1034 = vlaneseq
    %v1035 = vshrl.u32 %v1034, 7
    %v1036 = vsub.s32 %v1033, %v1035
    %v1037 = vrot.slane %v1030, %v1036
    %v1038 = vcombine.low %v672, %v673
    %v1040 = vunpack.c.l.s4 1983009808
    %v1041 = vunpack.c.0.s8 %v1040
    %v1042 = vlaneseq
    %v1043 = vshrl.u32 %v1042, 7
    %v1044 = vsub.s32 %v1041, %v1043
    %v1045 = vrot.slane %v1038, %v1044
    %v1046 = vcombine.low %v1021, %v1029
    %v1047 = vcombine.high %v1021, %v1029
    %v1049 = vunpack.c.l.s4 1934713408
    %v1050 = vunpack.c.0.s8 %v1049
    %v1051 = vlaneseq
    %v1052 = vshrl.u32 %v1051, 7
    %v1053 = vsub.s32 %v1050, %v1052
    %v1054 = vrot.slane %v1046, %v1053
    %v1056 = vunpack.c.l.s4 1934713408
    %v1057 = vunpack.c.0.s8 %v1056
    %v1058 = vlaneseq
    %v1059 = vshrl.u32 %v1058, 7
    %v1060 = vsub.s32 %v1057, %v1059
    %v1061 = vrot.slane %v1047, %v1060
    %v1062 = vcombine.low %v1037, %v1045
    %v1063 = vcombine.high %v1037, %v1045
    %v1065 = vunpack.c.l.s4 1934713408
    %v1066 = vunpack.c.0.s8 %v1065
    %v1067 = vlaneseq
    %v1068 = vshrl.u32 %v1067, 7
    %v1069 = vsub.s32 %v1066, %v1068
    %v1070 = vrot.slane %v1062, %v1069
    %v1072 = vunpack.c.l.s4 1934713408
    %v1073 = vunpack.c.0.s8 %v1072
    %v1074 = vlaneseq
    %v1075 = vshrl.u32 %v1074, 7
    %v1076 = vsub.s32 %v1073, %v1075
    %v1077 = vrot.slane %v1063, %v1076
    %v1078 = vcombine.low %v1054, %v1070
    %v1079 = vcombine.high %v1054, %v1070
    %v1080 = vcombine.low %v1061, %v1077
    %v1081 = vcombine.high %v1061, %v1077
    %v1082 = vpack.c.bf16 %v802, %v802
    %v1083 = vpack.c.bf16 %v938, %v938
    %v1084 = vpack.c.bf16 %v803, %v803
    %v1085 = vpack.c.bf16 %v939, %v939
    %v1086 = vpack.c.bf16 %v804, %v804
    %v1087 = vpack.c.bf16 %v940, %v940
    %v1088 = vpack.c.bf16 %v805, %v805
    %v1089 = vpack.c.bf16 %v941, %v941
    %v1090 = vpack.c.bf16 %v806, %v806
    %v1091 = vpack.c.bf16 %v942, %v942
    %v1092 = vpack.c.bf16 %v807, %v807
    %v1093 = vpack.c.bf16 %v943, %v943
    %v1094 = vpack.c.bf16 %v808, %v808
    %v1095 = vpack.c.bf16 %v944, %v944
    %v1096 = vpack.c.bf16 %v809, %v809
    %v1097 = vpack.c.bf16 %v945, %v945
    %v1098 = vpack.c.bf16 %v1010, %v1010
    %v1099 = vpack.c.bf16 %v1078, %v1078
    %v1100 = vpack.c.bf16 %v1011, %v1011
    %v1101 = vpack.c.bf16 %v1079, %v1079
    %v1102 = vpack.c.bf16 %v1012, %v1012
    %v1103 = vpack.c.bf16 %v1080, %v1080
    %v1104 = vpack.c.bf16 %v1013, %v1013
    %v1105 = vpack.c.bf16 %v1081, %v1081
    %vm1106 = vcmask 64512
    %v1108 = vsel %vm1106, %v1082, 0
    %v1111 = vsel %vm1106, %v1090, 0
    %1113 = vmatprep.subr.bf16.mxu0 0
    %1114 = vmatpush1.bf16.xpose.msra.mxu0 %v1111
    %1115 = vmatprep.subr.bf16.mxu0 0
    %1116 = vmatpush1.bf16.xpose.msra.mxu0 0
    %1117 = vmatprep.subr.bf16.mxu0 0
    %1118 = vmatpush1.bf16.xpose.msra.mxu0 0
    %1119 = vmatprep.subr.bf16.mxu0 0
    %1120 = vmatpush1.bf16.xpose.msra.mxu0 0
    %1121 = vmatprep.subr.bf16.mxu0 0
    %1122 = vmatpush1.bf16.xpose.msra.mxu0 0
    %1123 = vmatprep.subr.bf16.mxu0 0
    %1124 = vmatpush1.bf16.xpose.msra.mxu0 0
    %1125 = vmatprep.subr.bf16.mxu0 0
    %1126 = vmatpush1.bf16.xpose.msra.mxu0 0
    %1127 = vmatprep.subr.bf16.mxu0 0
    %1128 = vmatpush1.bf16.xpose.msra.mxu0 0
    %1129 = vmatprep.subr.bf16.mxu0 0
    %1130 = vmatpush1.bf16.xpose.msra.mxu0 0
    %1131 = vmatprep.subr.bf16.mxu0 0
    %1132 = vmatpush1.bf16.xpose.msra.mxu0 0
    %1133 = vmatprep.subr.bf16.mxu0 0
    %1134 = vmatpush1.bf16.xpose.msra.mxu0 0
    %1135 = vmatprep.subr.bf16.mxu0 0
    %1136 = vmatpush1.bf16.xpose.msra.mxu0 0
    %1137 = vmatprep.subr.bf16.mxu0 0
    %1138 = vmatpush1.bf16.xpose.msra.mxu0 0
    %1139 = vmatprep.subr.bf16.mxu0 0
    %1140 = vmatpush1.bf16.xpose.msra.mxu0 0
    %1141 = vmatprep.subr.bf16.mxu0 0
    %1142 = vmatpush1.bf16.xpose.msra.mxu0 0
    %1143 = vmatprep.subr.bf16.mxu0 0
    %1144 = vmatpush1.bf16.xpose.msra.mxu0 0
    %1145 = vmatprep.mubr.bf16.mxu0 0
    %1146 = vmatmul.mubr.bf16.gmra.mrb[0].mxu0 %v1108
    %v1147 = vpop.f32.mrb[0].mxu0
    %v1148 = vadd.f32 0.0, %v1147
    %v1149 = vpop.f32.mrb[0].mxu0
    %v1150 = vpop.f32.mrb[0].mxu0
    %v1151 = vpop.f32.mrb[0].mxu0
    %1152 = vdwg.mxu0
    %v1154 = vsel %vm1106, %v1083, 0
    %v1157 = vsel %vm1106, %v1091, 0
    %1159 = vmatprep.subr.bf16.mxu0 0
    %1160 = vmatpush1.bf16.xpose.msra.mxu0 %v1157
    %1161 = vmatprep.subr.bf16.mxu0 0
    %1162 = vmatpush1.bf16.xpose.msra.mxu0 0
    %1163 = vmatprep.subr.bf16.mxu0 0
    %1164 = vmatpush1.bf16.xpose.msra.mxu0 0
    %1165 = vmatprep.subr.bf16.mxu0 0
    %1166 = vmatpush1.bf16.xpose.msra.mxu0 0
    %1167 = vmatprep.subr.bf16.mxu0 0
    %1168 = vmatpush1.bf16.xpose.msra.mxu0 0
    %1169 = vmatprep.subr.bf16.mxu0 0
    %1170 = vmatpush1.bf16.xpose.msra.mxu0 0
    %1171 = vmatprep.subr.bf16.mxu0 0
    %1172 = vmatpush1.bf16.xpose.msra.mxu0 0
    %1173 = vmatprep.subr.bf16.mxu0 0
    %1174 = vmatpush1.bf16.xpose.msra.mxu0 0
    %1175 = vmatprep.subr.bf16.mxu0 0
    %1176 = vmatpush1.bf16.xpose.msra.mxu0 0
    %1177 = vmatprep.subr.bf16.mxu0 0
    %1178 = vmatpush1.bf16.xpose.msra.mxu0 0
    %1179 = vmatprep.subr.bf16.mxu0 0
    %1180 = vmatpush1.bf16.xpose.msra.mxu0 0
    %1181 = vmatprep.subr.bf16.mxu0 0
    %1182 = vmatpush1.bf16.xpose.msra.mxu0 0
    %1183 = vmatprep.subr.bf16.mxu0 0
    %1184 = vmatpush1.bf16.xpose.msra.mxu0 0
    %1185 = vmatprep.subr.bf16.mxu0 0
    %1186 = vmatpush1.bf16.xpose.msra.mxu0 0
    %1187 = vmatprep.subr.bf16.mxu0 0
    %1188 = vmatpush1.bf16.xpose.msra.mxu0 0
    %1189 = vmatprep.subr.bf16.mxu0 0
    %1190 = vmatpush1.bf16.xpose.msra.mxu0 0
    %1191 = vmatprep.mubr.bf16.mxu0 0
    %1192 = vmatmul.mubr.bf16.gmra.mrb[0].mxu0 %v1154
    %v1193 = vpop.f32.mrb[0].mxu0
    %v1194 = vadd.f32 0.0, %v1193
    %v1195 = vpop.f32.mrb[0].mxu0
    %v1196 = vpop.f32.mrb[0].mxu0
    %v1197 = vpop.f32.mrb[0].mxu0
    %1198 = vdwg.mxu0
    %v1200 = vsel %vm1106, %v1084, 0
    %v1203 = vsel %vm1106, %v1092, 0
    %1205 = vmatprep.subr.bf16.mxu0 0
    %1206 = vmatpush1.bf16.xpose.msra.mxu0 %v1203
    %1207 = vmatprep.subr.bf16.mxu0 0
    %1208 = vmatpush1.bf16.xpose.msra.mxu0 0
    %1209 = vmatprep.subr.bf16.mxu0 0
    %1210 = vmatpush1.bf16.xpose.msra.mxu0 0
    %1211 = vmatprep.subr.bf16.mxu0 0
    %1212 = vmatpush1.bf16.xpose.msra.mxu0 0
    %1213 = vmatprep.subr.bf16.mxu0 0
    %1214 = vmatpush1.bf16.xpose.msra.mxu0 0
    %1215 = vmatprep.subr.bf16.mxu0 0
    %1216 = vmatpush1.bf16.xpose.msra.mxu0 0
    %1217 = vmatprep.subr.bf16.mxu0 0
    %1218 = vmatpush1.bf16.xpose.msra.mxu0 0
    %1219 = vmatprep.subr.bf16.mxu0 0
    %1220 = vmatpush1.bf16.xpose.msra.mxu0 0
    %1221 = vmatprep.subr.bf16.mxu0 0
    %1222 = vmatpush1.bf16.xpose.msra.mxu0 0
    %1223 = vmatprep.subr.bf16.mxu0 0
    %1224 = vmatpush1.bf16.xpose.msra.mxu0 0
    %1225 = vmatprep.subr.bf16.mxu0 0
    %1226 = vmatpush1.bf16.xpose.msra.mxu0 0
    %1227 = vmatprep.subr.bf16.mxu0 0
    %1228 = vmatpush1.bf16.xpose.msra.mxu0 0
    %1229 = vmatprep.subr.bf16.mxu0 0
    %1230 = vmatpush1.bf16.xpose.msra.mxu0 0
    %1231 = vmatprep.subr.bf16.mxu0 0
    %1232 = vmatpush1.bf16.xpose.msra.mxu0 0
    %1233 = vmatprep.subr.bf16.mxu0 0
    %1234 = vmatpush1.bf16.xpose.msra.mxu0 0
    %1235 = vmatprep.subr.bf16.mxu0 0
    %1236 = vmatpush1.bf16.xpose.msra.mxu0 0
    %1237 = vmatprep.mubr.bf16.mxu0 0
    %1238 = vmatmul.mubr.bf16.gmra.mrb[0].mxu0 %v1200
    %v1239 = vpop.f32.mrb[0].mxu0
    %v1240 = vadd.f32 0.0, %v1239
    %v1241 = vpop.f32.mrb[0].mxu0
    %v1242 = vpop.f32.mrb[0].mxu0
    %v1243 = vpop.f32.mrb[0].mxu0
    %1244 = vdwg.mxu0
    %v1246 = vsel %vm1106, %v1085, 0
    %v1249 = vsel %vm1106, %v1093, 0
    %1251 = vmatprep.subr.bf16.mxu0 0
    %1252 = vmatpush1.bf16.xpose.msra.mxu0 %v1249
    %1253 = vmatprep.subr.bf16.mxu0 0
    %1254 = vmatpush1.bf16.xpose.msra.mxu0 0
    %1255 = vmatprep.subr.bf16.mxu0 0
    %1256 = vmatpush1.bf16.xpose.msra.mxu0 0
    %1257 = vmatprep.subr.bf16.mxu0 0
    %1258 = vmatpush1.bf16.xpose.msra.mxu0 0
    %1259 = vmatprep.subr.bf16.mxu0 0
    %1260 = vmatpush1.bf16.xpose.msra.mxu0 0
    %1261 = vmatprep.subr.bf16.mxu0 0
    %1262 = vmatpush1.bf16.xpose.msra.mxu0 0
    %1263 = vmatprep.subr.bf16.mxu0 0
    %1264 = vmatpush1.bf16.xpose.msra.mxu0 0
    %1265 = vmatprep.subr.bf16.mxu0 0
    %1266 = vmatpush1.bf16.xpose.msra.mxu0 0
    %1267 = vmatprep.subr.bf16.mxu0 0
    %1268 = vmatpush1.bf16.xpose.msra.mxu0 0
    %1269 = vmatprep.subr.bf16.mxu0 0
    %1270 = vmatpush1.bf16.xpose.msra.mxu0 0
    %1271 = vmatprep.subr.bf16.mxu0 0
    %1272 = vmatpush1.bf16.xpose.msra.mxu0 0
    %1273 = vmatprep.subr.bf16.mxu0 0
    %1274 = vmatpush1.bf16.xpose.msra.mxu0 0
    %1275 = vmatprep.subr.bf16.mxu0 0
    %1276 = vmatpush1.bf16.xpose.msra.mxu0 0
    %1277 = vmatprep.subr.bf16.mxu0 0
    %1278 = vmatpush1.bf16.xpose.msra.mxu0 0
    %1279 = vmatprep.subr.bf16.mxu0 0
    %1280 = vmatpush1.bf16.xpose.msra.mxu0 0
    %1281 = vmatprep.subr.bf16.mxu0 0
    %1282 = vmatpush1.bf16.xpose.msra.mxu0 0
    %1283 = vmatprep.mubr.bf16.mxu0 0
    %1284 = vmatmul.mubr.bf16.gmra.mrb[0].mxu0 %v1246
    %v1285 = vpop.f32.mrb[0].mxu0
    %v1286 = vadd.f32 0.0, %v1285
    %v1287 = vpop.f32.mrb[0].mxu0
    %v1288 = vpop.f32.mrb[0].mxu0
    %v1289 = vpop.f32.mrb[0].mxu0
    %1290 = vdwg.mxu0
    %v1292 = vsel %vm1106, %v1086, 0
    %v1295 = vsel %vm1106, %v1094, 0
    %1297 = vmatprep.subr.bf16.mxu0 0
    %1298 = vmatpush1.bf16.xpose.msra.mxu0 %v1295
    %1299 = vmatprep.subr.bf16.mxu0 0
    %1300 = vmatpush1.bf16.xpose.msra.mxu0 0
    %1301 = vmatprep.subr.bf16.mxu0 0
    %1302 = vmatpush1.bf16.xpose.msra.mxu0 0
    %1303 = vmatprep.subr.bf16.mxu0 0
    %1304 = vmatpush1.bf16.xpose.msra.mxu0 0
    %1305 = vmatprep.subr.bf16.mxu0 0
    %1306 = vmatpush1.bf16.xpose.msra.mxu0 0
    %1307 = vmatprep.subr.bf16.mxu0 0
    %1308 = vmatpush1.bf16.xpose.msra.mxu0 0
    %1309 = vmatprep.subr.bf16.mxu0 0
    %1310 = vmatpush1.bf16.xpose.msra.mxu0 0
    %1311 = vmatprep.subr.bf16.mxu0 0
    %1312 = vmatpush1.bf16.xpose.msra.mxu0 0
    %1313 = vmatprep.subr.bf16.mxu0 0
    %1314 = vmatpush1.bf16.xpose.msra.mxu0 0
    %1315 = vmatprep.subr.bf16.mxu0 0
    %1316 = vmatpush1.bf16.xpose.msra.mxu0 0
    %1317 = vmatprep.subr.bf16.mxu0 0
    %1318 = vmatpush1.bf16.xpose.msra.mxu0 0
    %1319 = vmatprep.subr.bf16.mxu0 0
    %1320 = vmatpush1.bf16.xpose.msra.mxu0 0
    %1321 = vmatprep.subr.bf16.mxu0 0
    %1322 = vmatpush1.bf16.xpose.msra.mxu0 0
    %1323 = vmatprep.subr.bf16.mxu0 0
    %1324 = vmatpush1.bf16.xpose.msra.mxu0 0
    %1325 = vmatprep.subr.bf16.mxu0 0
    %1326 = vmatpush1.bf16.xpose.msra.mxu0 0
    %1327 = vmatprep.subr.bf16.mxu0 0
    %1328 = vmatpush1.bf16.xpose.msra.mxu0 0
    %1329 = vmatprep.mubr.bf16.mxu0 0
    %1330 = vmatmul.mubr.bf16.gmra.mrb[0].mxu0 %v1292
    %v1331 = vpop.f32.mrb[0].mxu0
    %v1332 = vadd.f32 0.0, %v1331
    %v1333 = vpop.f32.mrb[0].mxu0
    %v1334 = vpop.f32.mrb[0].mxu0
    %v1335 = vpop.f32.mrb[0].mxu0
    %1336 = vdwg.mxu0
    %v1338 = vsel %vm1106, %v1087, 0
    %v1341 = vsel %vm1106, %v1095, 0
    %1343 = vmatprep.subr.bf16.mxu0 0
    %1344 = vmatpush1.bf16.xpose.msra.mxu0 %v1341
    %1345 = vmatprep.subr.bf16.mxu0 0
    %1346 = vmatpush1.bf16.xpose.msra.mxu0 0
    %1347 = vmatprep.subr.bf16.mxu0 0
    %1348 = vmatpush1.bf16.xpose.msra.mxu0 0
    %1349 = vmatprep.subr.bf16.mxu0 0
    %1350 = vmatpush1.bf16.xpose.msra.mxu0 0
    %1351 = vmatprep.subr.bf16.mxu0 0
    %1352 = vmatpush1.bf16.xpose.msra.mxu0 0
    %1353 = vmatprep.subr.bf16.mxu0 0
    %1354 = vmatpush1.bf16.xpose.msra.mxu0 0
    %1355 = vmatprep.subr.bf16.mxu0 0
    %1356 = vmatpush1.bf16.xpose.msra.mxu0 0
    %1357 = vmatprep.subr.bf16.mxu0 0
    %1358 = vmatpush1.bf16.xpose.msra.mxu0 0
    %1359 = vmatprep.subr.bf16.mxu0 0
    %1360 = vmatpush1.bf16.xpose.msra.mxu0 0
    %1361 = vmatprep.subr.bf16.mxu0 0
    %1362 = vmatpush1.bf16.xpose.msra.mxu0 0
    %1363 = vmatprep.subr.bf16.mxu0 0
    %1364 = vmatpush1.bf16.xpose.msra.mxu0 0
    %1365 = vmatprep.subr.bf16.mxu0 0
    %1366 = vmatpush1.bf16.xpose.msra.mxu0 0
    %1367 = vmatprep.subr.bf16.mxu0 0
    %1368 = vmatpush1.bf16.xpose.msra.mxu0 0
    %1369 = vmatprep.subr.bf16.mxu0 0
    %1370 = vmatpush1.bf16.xpose.msra.mxu0 0
    %1371 = vmatprep.subr.bf16.mxu0 0
    %1372 = vmatpush1.bf16.xpose.msra.mxu0 0
    %1373 = vmatprep.subr.bf16.mxu0 0
    %1374 = vmatpush1.bf16.xpose.msra.mxu0 0
    %1375 = vmatprep.mubr.bf16.mxu0 0
    %1376 = vmatmul.mubr.bf16.gmra.mrb[0].mxu0 %v1338
    %v1377 = vpop.f32.mrb[0].mxu0
    %v1378 = vadd.f32 0.0, %v1377
    %v1379 = vpop.f32.mrb[0].mxu0
    %v1380 = vpop.f32.mrb[0].mxu0
    %v1381 = vpop.f32.mrb[0].mxu0
    %1382 = vdwg.mxu0
    %v1384 = vsel %vm1106, %v1088, 0
    %v1387 = vsel %vm1106, %v1096, 0
    %1389 = vmatprep.subr.bf16.mxu0 0
    %1390 = vmatpush1.bf16.xpose.msra.mxu0 %v1387
    %1391 = vmatprep.subr.bf16.mxu0 0
    %1392 = vmatpush1.bf16.xpose.msra.mxu0 0
    %1393 = vmatprep.subr.bf16.mxu0 0
    %1394 = vmatpush1.bf16.xpose.msra.mxu0 0
    %1395 = vmatprep.subr.bf16.mxu0 0
    %1396 = vmatpush1.bf16.xpose.msra.mxu0 0
    %1397 = vmatprep.subr.bf16.mxu0 0
    %1398 = vmatpush1.bf16.xpose.msra.mxu0 0
    %1399 = vmatprep.subr.bf16.mxu0 0
    %1400 = vmatpush1.bf16.xpose.msra.mxu0 0
    %1401 = vmatprep.subr.bf16.mxu0 0
    %1402 = vmatpush1.bf16.xpose.msra.mxu0 0
    %1403 = vmatprep.subr.bf16.mxu0 0
    %1404 = vmatpush1.bf16.xpose.msra.mxu0 0
    %1405 = vmatprep.subr.bf16.mxu0 0
    %1406 = vmatpush1.bf16.xpose.msra.mxu0 0
    %1407 = vmatprep.subr.bf16.mxu0 0
    %1408 = vmatpush1.bf16.xpose.msra.mxu0 0
    %1409 = vmatprep.subr.bf16.mxu0 0
    %1410 = vmatpush1.bf16.xpose.msra.mxu0 0
    %1411 = vmatprep.subr.bf16.mxu0 0
    %1412 = vmatpush1.bf16.xpose.msra.mxu0 0
    %1413 = vmatprep.subr.bf16.mxu0 0
    %1414 = vmatpush1.bf16.xpose.msra.mxu0 0
    %1415 = vmatprep.subr.bf16.mxu0 0
    %1416 = vmatpush1.bf16.xpose.msra.mxu0 0
    %1417 = vmatprep.subr.bf16.mxu0 0
    %1418 = vmatpush1.bf16.xpose.msra.mxu0 0
    %1419 = vmatprep.subr.bf16.mxu0 0
    %1420 = vmatpush1.bf16.xpose.msra.mxu0 0
    %1421 = vmatprep.mubr.bf16.mxu0 0
    %1422 = vmatmul.mubr.bf16.gmra.mrb[0].mxu0 %v1384
    %v1423 = vpop.f32.mrb[0].mxu0
    %v1424 = vadd.f32 0.0, %v1423
    %v1425 = vpop.f32.mrb[0].mxu0
    %v1426 = vpop.f32.mrb[0].mxu0
    %v1427 = vpop.f32.mrb[0].mxu0
    %1428 = vdwg.mxu0
    %v1430 = vsel %vm1106, %v1089, 0
    %v1433 = vsel %vm1106, %v1097, 0
    %1435 = vmatprep.subr.bf16.mxu0 0
    %1436 = vmatpush1.bf16.xpose.msra.mxu0 %v1433
    %1437 = vmatprep.subr.bf16.mxu0 0
    %1438 = vmatpush1.bf16.xpose.msra.mxu0 0
    %1439 = vmatprep.subr.bf16.mxu0 0
    %1440 = vmatpush1.bf16.xpose.msra.mxu0 0
    %1441 = vmatprep.subr.bf16.mxu0 0
    %1442 = vmatpush1.bf16.xpose.msra.mxu0 0
    %1443 = vmatprep.subr.bf16.mxu0 0
    %1444 = vmatpush1.bf16.xpose.msra.mxu0 0
    %1445 = vmatprep.subr.bf16.mxu0 0
    %1446 = vmatpush1.bf16.xpose.msra.mxu0 0
    %1447 = vmatprep.subr.bf16.mxu0 0
    %1448 = vmatpush1.bf16.xpose.msra.mxu0 0
    %1449 = vmatprep.subr.bf16.mxu0 0
    %1450 = vmatpush1.bf16.xpose.msra.mxu0 0
    %1451 = vmatprep.subr.bf16.mxu0 0
    %1452 = vmatpush1.bf16.xpose.msra.mxu0 0
    %1453 = vmatprep.subr.bf16.mxu0 0
    %1454 = vmatpush1.bf16.xpose.msra.mxu0 0
    %1455 = vmatprep.subr.bf16.mxu0 0
    %1456 = vmatpush1.bf16.xpose.msra.mxu0 0
    %1457 = vmatprep.subr.bf16.mxu0 0
    %1458 = vmatpush1.bf16.xpose.msra.mxu0 0
    %1459 = vmatprep.subr.bf16.mxu0 0
    %1460 = vmatpush1.bf16.xpose.msra.mxu0 0
    %1461 = vmatprep.subr.bf16.mxu0 0
    %1462 = vmatpush1.bf16.xpose.msra.mxu0 0
    %1463 = vmatprep.subr.bf16.mxu0 0
    %1464 = vmatpush1.bf16.xpose.msra.mxu0 0
    %1465 = vmatprep.subr.bf16.mxu0 0
    %1466 = vmatpush1.bf16.xpose.msra.mxu0 0
    %1467 = vmatprep.mubr.bf16.mxu0 0
    %1468 = vmatmul.mubr.bf16.gmra.mrb[0].mxu0 %v1430
    %v1469 = vpop.f32.mrb[0].mxu0
    %v1470 = vadd.f32 0.0, %v1469
    %v1471 = vpop.f32.mrb[0].mxu0
    %v1472 = vpop.f32.mrb[0].mxu0
    %v1473 = vpop.f32.mrb[0].mxu0
    %1474 = vdwg.mxu0
    %v1475 = vmul.f32 %v1148, 0.35355338
    %v1476 = vmul.f32 %v1194, 0.35355338
    %v1477 = vmul.f32 %v1240, 0.35355338
    %v1478 = vmul.f32 %v1286, 0.35355338
    %v1479 = vmul.f32 %v1332, 0.35355338
    %v1480 = vmul.f32 %v1378, 0.35355338
    %v1481 = vmul.f32 %v1424, 0.35355338
    %v1482 = vmul.f32 %v1470, 0.35355338
    %v1483 = vsel %vm1106, %v1475, -inf
    %1484 = vmax.xlane.f32.xlu0 %v1483
    %v1485 = vpop.xlane.xlu0 %1484
    %v1486 = vsel %vm1106, %v1476, -inf
    %1487 = vmax.xlane.f32.xlu0 %v1486
    %v1488 = vpop.xlane.xlu0 %1487
    %v1489 = vsel %vm1106, %v1477, -inf
    %1490 = vmax.xlane.f32.xlu0 %v1489
    %v1491 = vpop.xlane.xlu0 %1490
    %v1492 = vsel %vm1106, %v1478, -inf
    %1493 = vmax.xlane.f32.xlu0 %v1492
    %v1494 = vpop.xlane.xlu0 %1493
    %v1495 = vsel %vm1106, %v1479, -inf
    %1496 = vmax.xlane.f32.xlu0 %v1495
    %v1497 = vpop.xlane.xlu0 %1496
    %v1498 = vsel %vm1106, %v1480, -inf
    %1499 = vmax.xlane.f32.xlu0 %v1498
    %v1500 = vpop.xlane.xlu0 %1499
    %v1501 = vsel %vm1106, %v1481, -inf
    %1502 = vmax.xlane.f32.xlu0 %v1501
    %v1503 = vpop.xlane.xlu0 %1502
    %v1504 = vsel %vm1106, %v1482, -inf
    %1505 = vmax.xlane.f32.xlu0 %v1504
    %v1506 = vpop.xlane.xlu0 %1505
    %v1507 = vsub.f32 %v1475, %v1485
    %v1508 = vsub.f32 %v1476, %v1488
    %v1509 = vsub.f32 %v1477, %v1491
    %v1510 = vsub.f32 %v1478, %v1494
    %v1511 = vsub.f32 %v1479, %v1497
    %v1512 = vsub.f32 %v1480, %v1500
    %v1513 = vsub.f32 %v1481, %v1503
    %v1514 = vsub.f32 %v1482, %v1506
    %v1515 = vmul.f32 %v1507, 1.442695
    %v1516 = vpow.pop %v1515
    %v1517 = vmul.f32 %v1508, 1.442695
    %v1518 = vpow.pop %v1517
    %v1519 = vmul.f32 %v1509, 1.442695
    %v1520 = vpow.pop %v1519
    %v1521 = vmul.f32 %v1510, 1.442695
    %v1522 = vpow.pop %v1521
    %v1523 = vmul.f32 %v1511, 1.442695
    %v1524 = vpow.pop %v1523
    %v1525 = vmul.f32 %v1512, 1.442695
    %v1526 = vpow.pop %v1525
    %v1527 = vmul.f32 %v1513, 1.442695
    %v1528 = vpow.pop %v1527
    %v1529 = vmul.f32 %v1514, 1.442695
    %v1530 = vpow.pop %v1529
    %v1531 = vsel %vm1106, %v1516, 0.0
    %1532 = vadd.xlane.f32.xlu0 %v1531
    %v1533 = vpop.xlane.xlu0 %1532
    %v1534 = vsel %vm1106, %v1518, 0.0
    %1535 = vadd.xlane.f32.xlu0 %v1534
    %v1536 = vpop.xlane.xlu0 %1535
    %v1537 = vsel %vm1106, %v1520, 0.0
    %1538 = vadd.xlane.f32.xlu0 %v1537
    %v1539 = vpop.xlane.xlu0 %1538
    %v1540 = vsel %vm1106, %v1522, 0.0
    %1541 = vadd.xlane.f32.xlu0 %v1540
    %v1542 = vpop.xlane.xlu0 %1541
    %v1543 = vsel %vm1106, %v1524, 0.0
    %1544 = vadd.xlane.f32.xlu0 %v1543
    %v1545 = vpop.xlane.xlu0 %1544
    %v1546 = vsel %vm1106, %v1526, 0.0
    %1547 = vadd.xlane.f32.xlu0 %v1546
    %v1548 = vpop.xlane.xlu0 %1547
    %v1549 = vsel %vm1106, %v1528, 0.0
    %1550 = vadd.xlane.f32.xlu0 %v1549
    %v1551 = vpop.xlane.xlu0 %1550
    %v1552 = vsel %vm1106, %v1530, 0.0
    %1553 = vadd.xlane.f32.xlu0 %v1552
    %v1554 = vpop.xlane.xlu0 %1553
    %v1555 = vrcp.pop %v1533
    %v1556 = vrcp.pop %v1536
    %v1557 = vrcp.pop %v1539
    %v1558 = vrcp.pop %v1542
    %v1559 = vrcp.pop %v1545
    %v1560 = vrcp.pop %v1548
    %v1561 = vrcp.pop %v1551
    %v1562 = vrcp.pop %v1554
    %v1563 = vmul.f32 %v1516, %v1555
    %v1564 = vmul.f32 %v1518, %v1556
    %v1565 = vmul.f32 %v1520, %v1557
    %v1566 = vmul.f32 %v1522, %v1558
    %v1567 = vmul.f32 %v1524, %v1559
    %v1568 = vmul.f32 %v1526, %v1560
    %v1569 = vmul.f32 %v1528, %v1561
    %v1570 = vmul.f32 %v1530, %v1562
    %v1571 = vpack.c.bf16 %v1563, %v1563
    %v1572 = vpack.c.bf16 %v1564, %v1564
    %v1573 = vpack.c.bf16 %v1565, %v1565
    %v1574 = vpack.c.bf16 %v1566, %v1566
    %v1575 = vpack.c.bf16 %v1567, %v1567
    %v1576 = vpack.c.bf16 %v1568, %v1568
    %v1577 = vpack.c.bf16 %v1569, %v1569
    %v1578 = vpack.c.bf16 %v1570, %v1570
    %v1580 = vsel %vm1106, %v1571, 0
    %vm1582 = vcmask 1043456
    %v1584 = vsel %vm1582, %v1098, 0
    %1586 = vmatprep.subr.bf16.mxu0 0
    %1587 = vmatpush1.bf16.msra.mxu0 %v1584
    %1588 = vmatprep.subr.bf16.mxu0 0
    %1589 = vmatpush1.bf16.msra.mxu0 0
    %1590 = vmatprep.subr.bf16.mxu0 0
    %1591 = vmatpush1.bf16.msra.mxu0 0
    %1592 = vmatprep.subr.bf16.mxu0 0
    %1593 = vmatpush1.bf16.msra.mxu0 0
    %1594 = vmatprep.subr.bf16.mxu0 0
    %1595 = vmatpush1.bf16.msra.mxu0 0
    %1596 = vmatprep.subr.bf16.mxu0 0
    %1597 = vmatpush1.bf16.msra.mxu0 0
    %1598 = vmatprep.subr.bf16.mxu0 0
    %1599 = vmatpush1.bf16.msra.mxu0 0
    %1600 = vmatprep.subr.bf16.mxu0 0
    %1601 = vmatpush1.bf16.msra.mxu0 0
    %1602 = vmatprep.subr.bf16.mxu0 0
    %1603 = vmatpush1.bf16.msra.mxu0 0
    %1604 = vmatprep.subr.bf16.mxu0 0
    %1605 = vmatpush1.bf16.msra.mxu0 0
    %1606 = vmatprep.subr.bf16.mxu0 0
    %1607 = vmatpush1.bf16.msra.mxu0 0
    %1608 = vmatprep.subr.bf16.mxu0 0
    %1609 = vmatpush1.bf16.msra.mxu0 0
    %1610 = vmatprep.subr.bf16.mxu0 0
    %1611 = vmatpush1.bf16.msra.mxu0 0
    %1612 = vmatprep.subr.bf16.mxu0 0
    %1613 = vmatpush1.bf16.msra.mxu0 0
    %1614 = vmatprep.subr.bf16.mxu0 0
    %1615 = vmatpush1.bf16.msra.mxu0 0
    %1616 = vmatprep.subr.bf16.mxu0 0
    %1617 = vmatpush1.bf16.msra.mxu0 0
    %1618 = vmatprep.mubr.bf16.mxu0 0
    %1619 = vmatmul.mubr.bf16.gmra.mrb[0].mxu0 %v1580
    %v1620 = vpop.f32.mrb[0].mxu0
    %v1621 = vadd.f32 0.0, %v1620
    %v1622 = vpop.f32.mrb[0].mxu0
    %v1623 = vpop.f32.mrb[0].mxu0
    %v1624 = vpop.f32.mrb[0].mxu0
    %1625 = vdwg.mxu0
    %v1627 = vsel %vm1106, %v1572, 0
    %v1630 = vsel %vm1582, %v1099, 0
    %1632 = vmatprep.subr.bf16.mxu0 0
    %1633 = vmatpush1.bf16.msra.mxu0 %v1630
    %1634 = vmatprep.subr.bf16.mxu0 0
    %1635 = vmatpush1.bf16.msra.mxu0 0
    %1636 = vmatprep.subr.bf16.mxu0 0
    %1637 = vmatpush1.bf16.msra.mxu0 0
    %1638 = vmatprep.subr.bf16.mxu0 0
    %1639 = vmatpush1.bf16.msra.mxu0 0
    %1640 = vmatprep.subr.bf16.mxu0 0
    %1641 = vmatpush1.bf16.msra.mxu0 0
    %1642 = vmatprep.subr.bf16.mxu0 0
    %1643 = vmatpush1.bf16.msra.mxu0 0
    %1644 = vmatprep.subr.bf16.mxu0 0
    %1645 = vmatpush1.bf16.msra.mxu0 0
    %1646 = vmatprep.subr.bf16.mxu0 0
    %1647 = vmatpush1.bf16.msra.mxu0 0
    %1648 = vmatprep.subr.bf16.mxu0 0
    %1649 = vmatpush1.bf16.msra.mxu0 0
    %1650 = vmatprep.subr.bf16.mxu0 0
    %1651 = vmatpush1.bf16.msra.mxu0 0
    %1652 = vmatprep.subr.bf16.mxu0 0
    %1653 = vmatpush1.bf16.msra.mxu0 0
    %1654 = vmatprep.subr.bf16.mxu0 0
    %1655 = vmatpush1.bf16.msra.mxu0 0
    %1656 = vmatprep.subr.bf16.mxu0 0
    %1657 = vmatpush1.bf16.msra.mxu0 0
    %1658 = vmatprep.subr.bf16.mxu0 0
    %1659 = vmatpush1.bf16.msra.mxu0 0
    %1660 = vmatprep.subr.bf16.mxu0 0
    %1661 = vmatpush1.bf16.msra.mxu0 0
    %1662 = vmatprep.subr.bf16.mxu0 0
    %1663 = vmatpush1.bf16.msra.mxu0 0
    %1664 = vmatprep.mubr.bf16.mxu0 0
    %1665 = vmatmul.mubr.bf16.gmra.mrb[0].mxu0 %v1627
    %v1666 = vpop.f32.mrb[0].mxu0
    %v1667 = vadd.f32 0.0, %v1666
    %v1668 = vpop.f32.mrb[0].mxu0
    %v1669 = vpop.f32.mrb[0].mxu0
    %v1670 = vpop.f32.mrb[0].mxu0
    %1671 = vdwg.mxu0
    %v1673 = vsel %vm1106, %v1573, 0
    %v1676 = vsel %vm1582, %v1100, 0
    %1678 = vmatprep.subr.bf16.mxu0 0
    %1679 = vmatpush1.bf16.msra.mxu0 %v1676
    %1680 = vmatprep.subr.bf16.mxu0 0
    %1681 = vmatpush1.bf16.msra.mxu0 0
    %1682 = vmatprep.subr.bf16.mxu0 0
    %1683 = vmatpush1.bf16.msra.mxu0 0
    %1684 = vmatprep.subr.bf16.mxu0 0
    %1685 = vmatpush1.bf16.msra.mxu0 0
    %1686 = vmatprep.subr.bf16.mxu0 0
    %1687 = vmatpush1.bf16.msra.mxu0 0
    %1688 = vmatprep.subr.bf16.mxu0 0
    %1689 = vmatpush1.bf16.msra.mxu0 0
    %1690 = vmatprep.subr.bf16.mxu0 0
    %1691 = vmatpush1.bf16.msra.mxu0 0
    %1692 = vmatprep.subr.bf16.mxu0 0
    %1693 = vmatpush1.bf16.msra.mxu0 0
    %1694 = vmatprep.subr.bf16.mxu0 0
    %1695 = vmatpush1.bf16.msra.mxu0 0
    %1696 = vmatprep.subr.bf16.mxu0 0
    %1697 = vmatpush1.bf16.msra.mxu0 0
    %1698 = vmatprep.subr.bf16.mxu0 0
    %1699 = vmatpush1.bf16.msra.mxu0 0
    %1700 = vmatprep.subr.bf16.mxu0 0
    %1701 = vmatpush1.bf16.msra.mxu0 0
    %1702 = vmatprep.subr.bf16.mxu0 0
    %1703 = vmatpush1.bf16.msra.mxu0 0
    %1704 = vmatprep.subr.bf16.mxu0 0
    %1705 = vmatpush1.bf16.msra.mxu0 0
    %1706 = vmatprep.subr.bf16.mxu0 0
    %1707 = vmatpush1.bf16.msra.mxu0 0
    %1708 = vmatprep.subr.bf16.mxu0 0
    %1709 = vmatpush1.bf16.msra.mxu0 0
    %1710 = vmatprep.mubr.bf16.mxu0 0
    %1711 = vmatmul.mubr.bf16.gmra.mrb[0].mxu0 %v1673
    %v1712 = vpop.f32.mrb[0].mxu0
    %v1713 = vadd.f32 0.0, %v1712
    %v1714 = vpop.f32.mrb[0].mxu0
    %v1715 = vpop.f32.mrb[0].mxu0
    %v1716 = vpop.f32.mrb[0].mxu0
    %1717 = vdwg.mxu0
    %v1719 = vsel %vm1106, %v1574, 0
    %v1722 = vsel %vm1582, %v1101, 0
    %1724 = vmatprep.subr.bf16.mxu0 0
    %1725 = vmatpush1.bf16.msra.mxu0 %v1722
    %1726 = vmatprep.subr.bf16.mxu0 0
    %1727 = vmatpush1.bf16.msra.mxu0 0
    %1728 = vmatprep.subr.bf16.mxu0 0
    %1729 = vmatpush1.bf16.msra.mxu0 0
    %1730 = vmatprep.subr.bf16.mxu0 0
    %1731 = vmatpush1.bf16.msra.mxu0 0
    %1732 = vmatprep.subr.bf16.mxu0 0
    %1733 = vmatpush1.bf16.msra.mxu0 0
    %1734 = vmatprep.subr.bf16.mxu0 0
    %1735 = vmatpush1.bf16.msra.mxu0 0
    %1736 = vmatprep.subr.bf16.mxu0 0
    %1737 = vmatpush1.bf16.msra.mxu0 0
    %1738 = vmatprep.subr.bf16.mxu0 0
    %1739 = vmatpush1.bf16.msra.mxu0 0
    %1740 = vmatprep.subr.bf16.mxu0 0
    %1741 = vmatpush1.bf16.msra.mxu0 0
    %1742 = vmatprep.subr.bf16.mxu0 0
    %1743 = vmatpush1.bf16.msra.mxu0 0
    %1744 = vmatprep.subr.bf16.mxu0 0
    %1745 = vmatpush1.bf16.msra.mxu0 0
    %1746 = vmatprep.subr.bf16.mxu0 0
    %1747 = vmatpush1.bf16.msra.mxu0 0
    %1748 = vmatprep.subr.bf16.mxu0 0
    %1749 = vmatpush1.bf16.msra.mxu0 0
    %1750 = vmatprep.subr.bf16.mxu0 0
    %1751 = vmatpush1.bf16.msra.mxu0 0
    %1752 = vmatprep.subr.bf16.mxu0 0
    %1753 = vmatpush1.bf16.msra.mxu0 0
    %1754 = vmatprep.subr.bf16.mxu0 0
    %1755 = vmatpush1.bf16.msra.mxu0 0
    %1756 = vmatprep.mubr.bf16.mxu0 0
    %1757 = vmatmul.mubr.bf16.gmra.mrb[0].mxu0 %v1719
    %v1758 = vpop.f32.mrb[0].mxu0
    %v1759 = vadd.f32 0.0, %v1758
    %v1760 = vpop.f32.mrb[0].mxu0
    %v1761 = vpop.f32.mrb[0].mxu0
    %v1762 = vpop.f32.mrb[0].mxu0
    %1763 = vdwg.mxu0
    %v1765 = vsel %vm1106, %v1575, 0
    %v1768 = vsel %vm1582, %v1102, 0
    %1770 = vmatprep.subr.bf16.mxu0 0
    %1771 = vmatpush1.bf16.msra.mxu0 %v1768
    %1772 = vmatprep.subr.bf16.mxu0 0
    %1773 = vmatpush1.bf16.msra.mxu0 0
    %1774 = vmatprep.subr.bf16.mxu0 0
    %1775 = vmatpush1.bf16.msra.mxu0 0
    %1776 = vmatprep.subr.bf16.mxu0 0
    %1777 = vmatpush1.bf16.msra.mxu0 0
    %1778 = vmatprep.subr.bf16.mxu0 0
    %1779 = vmatpush1.bf16.msra.mxu0 0
    %1780 = vmatprep.subr.bf16.mxu0 0
    %1781 = vmatpush1.bf16.msra.mxu0 0
    %1782 = vmatprep.subr.bf16.mxu0 0
    %1783 = vmatpush1.bf16.msra.mxu0 0
    %1784 = vmatprep.subr.bf16.mxu0 0
    %1785 = vmatpush1.bf16.msra.mxu0 0
    %1786 = vmatprep.subr.bf16.mxu0 0
    %1787 = vmatpush1.bf16.msra.mxu0 0
    %1788 = vmatprep.subr.bf16.mxu0 0
    %1789 = vmatpush1.bf16.msra.mxu0 0
    %1790 = vmatprep.subr.bf16.mxu0 0
    %1791 = vmatpush1.bf16.msra.mxu0 0
    %1792 = vmatprep.subr.bf16.mxu0 0
    %1793 = vmatpush1.bf16.msra.mxu0 0
    %1794 = vmatprep.subr.bf16.mxu0 0
    %1795 = vmatpush1.bf16.msra.mxu0 0
    %1796 = vmatprep.subr.bf16.mxu0 0
    %1797 = vmatpush1.bf16.msra.mxu0 0
    %1798 = vmatprep.subr.bf16.mxu0 0
    %1799 = vmatpush1.bf16.msra.mxu0 0
    %1800 = vmatprep.subr.bf16.mxu0 0
    %1801 = vmatpush1.bf16.msra.mxu0 0
    %1802 = vmatprep.mubr.bf16.mxu0 0
    %1803 = vmatmul.mubr.bf16.gmra.mrb[0].mxu0 %v1765
    %v1804 = vpop.f32.mrb[0].mxu0
    %v1805 = vadd.f32 0.0, %v1804
    %v1806 = vpop.f32.mrb[0].mxu0
    %v1807 = vpop.f32.mrb[0].mxu0
    %v1808 = vpop.f32.mrb[0].mxu0
    %1809 = vdwg.mxu0
    %v1811 = vsel %vm1106, %v1576, 0
    %v1814 = vsel %vm1582, %v1103, 0
    %1816 = vmatprep.subr.bf16.mxu0 0
    %1817 = vmatpush1.bf16.msra.mxu0 %v1814
    %1818 = vmatprep.subr.bf16.mxu0 0
    %1819 = vmatpush1.bf16.msra.mxu0 0
    %1820 = vmatprep.subr.bf16.mxu0 0
    %1821 = vmatpush1.bf16.msra.mxu0 0
    %1822 = vmatprep.subr.bf16.mxu0 0
    %1823 = vmatpush1.bf16.msra.mxu0 0
    %1824 = vmatprep.subr.bf16.mxu0 0
    %1825 = vmatpush1.bf16.msra.mxu0 0
    %1826 = vmatprep.subr.bf16.mxu0 0
    %1827 = vmatpush1.bf16.msra.mxu0 0
    %1828 = vmatprep.subr.bf16.mxu0 0
    %1829 = vmatpush1.bf16.msra.mxu0 0
    %1830 = vmatprep.subr.bf16.mxu0 0
    %1831 = vmatpush1.bf16.msra.mxu0 0
    %1832 = vmatprep.subr.bf16.mxu0 0
    %1833 = vmatpush1.bf16.msra.mxu0 0
    %1834 = vmatprep.subr.bf16.mxu0 0
    %1835 = vmatpush1.bf16.msra.mxu0 0
    %1836 = vmatprep.subr.bf16.mxu0 0
    %1837 = vmatpush1.bf16.msra.mxu0 0
    %1838 = vmatprep.subr.bf16.mxu0 0
    %1839 = vmatpush1.bf16.msra.mxu0 0
    %1840 = vmatprep.subr.bf16.mxu0 0
    %1841 = vmatpush1.bf16.msra.mxu0 0
    %1842 = vmatprep.subr.bf16.mxu0 0
    %1843 = vmatpush1.bf16.msra.mxu0 0
    %1844 = vmatprep.subr.bf16.mxu0 0
    %1845 = vmatpush1.bf16.msra.mxu0 0
    %1846 = vmatprep.subr.bf16.mxu0 0
    %1847 = vmatpush1.bf16.msra.mxu0 0
    %1848 = vmatprep.mubr.bf16.mxu0 0
    %1849 = vmatmul.mubr.bf16.gmra.mrb[0].mxu0 %v1811
    %v1850 = vpop.f32.mrb[0].mxu0
    %v1851 = vadd.f32 0.0, %v1850
    %v1852 = vpop.f32.mrb[0].mxu0
    %v1853 = vpop.f32.mrb[0].mxu0
    %v1854 = vpop.f32.mrb[0].mxu0
    %1855 = vdwg.mxu0
    %v1857 = vsel %vm1106, %v1577, 0
    %v1860 = vsel %vm1582, %v1104, 0
    %1862 = vmatprep.subr.bf16.mxu0 0
    %1863 = vmatpush1.bf16.msra.mxu0 %v1860
    %1864 = vmatprep.subr.bf16.mxu0 0
    %1865 = vmatpush1.bf16.msra.mxu0 0
    %1866 = vmatprep.subr.bf16.mxu0 0
    %1867 = vmatpush1.bf16.msra.mxu0 0
    %1868 = vmatprep.subr.bf16.mxu0 0
    %1869 = vmatpush1.bf16.msra.mxu0 0
    %1870 = vmatprep.subr.bf16.mxu0 0
    %1871 = vmatpush1.bf16.msra.mxu0 0
    %1872 = vmatprep.subr.bf16.mxu0 0
    %1873 = vmatpush1.bf16.msra.mxu0 0
    %1874 = vmatprep.subr.bf16.mxu0 0
    %1875 = vmatpush1.bf16.msra.mxu0 0
    %1876 = vmatprep.subr.bf16.mxu0 0
    %1877 = vmatpush1.bf16.msra.mxu0 0
    %1878 = vmatprep.subr.bf16.mxu0 0
    %1879 = vmatpush1.bf16.msra.mxu0 0
    %1880 = vmatprep.subr.bf16.mxu0 0
    %1881 = vmatpush1.bf16.msra.mxu0 0
    %1882 = vmatprep.subr.bf16.mxu0 0
    %1883 = vmatpush1.bf16.msra.mxu0 0
    %1884 = vmatprep.subr.bf16.mxu0 0
    %1885 = vmatpush1.bf16.msra.mxu0 0
    %1886 = vmatprep.subr.bf16.mxu0 0
    %1887 = vmatpush1.bf16.msra.mxu0 0
    %1888 = vmatprep.subr.bf16.mxu0 0
    %1889 = vmatpush1.bf16.msra.mxu0 0
    %1890 = vmatprep.subr.bf16.mxu0 0
    %1891 = vmatpush1.bf16.msra.mxu0 0
    %1892 = vmatprep.subr.bf16.mxu0 0
    %1893 = vmatpush1.bf16.msra.mxu0 0
    %1894 = vmatprep.mubr.bf16.mxu0 0
    %1895 = vmatmul.mubr.bf16.gmra.mrb[0].mxu0 %v1857
    %v1896 = vpop.f32.mrb[0].mxu0
    %v1897 = vadd.f32 0.0, %v1896
    %v1898 = vpop.f32.mrb[0].mxu0
    %v1899 = vpop.f32.mrb[0].mxu0
    %v1900 = vpop.f32.mrb[0].mxu0
    %1901 = vdwg.mxu0
    %v1903 = vsel %vm1106, %v1578, 0
    %v1906 = vsel %vm1582, %v1105, 0
    %1908 = vmatprep.subr.bf16.mxu0 0
    %1909 = vmatpush1.bf16.msra.mxu0 %v1906
    %1910 = vmatprep.subr.bf16.mxu0 0
    %1911 = vmatpush1.bf16.msra.mxu0 0
    %1912 = vmatprep.subr.bf16.mxu0 0
    %1913 = vmatpush1.bf16.msra.mxu0 0
    %1914 = vmatprep.subr.bf16.mxu0 0
    %1915 = vmatpush1.bf16.msra.mxu0 0
    %1916 = vmatprep.subr.bf16.mxu0 0
    %1917 = vmatpush1.bf16.msra.mxu0 0
    %1918 = vmatprep.subr.bf16.mxu0 0
    %1919 = vmatpush1.bf16.msra.mxu0 0
    %1920 = vmatprep.subr.bf16.mxu0 0
    %1921 = vmatpush1.bf16.msra.mxu0 0
    %1922 = vmatprep.subr.bf16.mxu0 0
    %1923 = vmatpush1.bf16.msra.mxu0 0
    %1924 = vmatprep.subr.bf16.mxu0 0
    %1925 = vmatpush1.bf16.msra.mxu0 0
    %1926 = vmatprep.subr.bf16.mxu0 0
    %1927 = vmatpush1.bf16.msra.mxu0 0
    %1928 = vmatprep.subr.bf16.mxu0 0
    %1929 = vmatpush1.bf16.msra.mxu0 0
    %1930 = vmatprep.subr.bf16.mxu0 0
    %1931 = vmatpush1.bf16.msra.mxu0 0
    %1932 = vmatprep.subr.bf16.mxu0 0
    %1933 = vmatpush1.bf16.msra.mxu0 0
    %1934 = vmatprep.subr.bf16.mxu0 0
    %1935 = vmatpush1.bf16.msra.mxu0 0
    %1936 = vmatprep.subr.bf16.mxu0 0
    %1937 = vmatpush1.bf16.msra.mxu0 0
    %1938 = vmatprep.subr.bf16.mxu0 0
    %1939 = vmatpush1.bf16.msra.mxu0 0
    %1940 = vmatprep.mubr.bf16.mxu0 0
    %1941 = vmatmul.mubr.bf16.gmra.mrb[0].mxu0 %v1903
    %v1942 = vpop.f32.mrb[0].mxu0
    %v1943 = vadd.f32 0.0, %v1942
    %v1944 = vpop.f32.mrb[0].mxu0
    %v1945 = vpop.f32.mrb[0].mxu0
    %v1946 = vpop.f32.mrb[0].mxu0
    %1947 = vdwg.mxu0
    %v1948 = vcombine.low %v1621, %v1805
    %v1949 = vcombine.high %v1621, %v1805
    %v1951 = vunpack.c.l.s4 1983009808
    %v1952 = vunpack.c.0.s8 %v1951
    %v1953 = vlaneseq
    %v1954 = vshrl.u32 %v1953, 7
    %v1955 = vsub.s32 %v1952, %v1954
    %v1956 = vrot.slane %v1948, %v1955
    %v1958 = vunpack.c.l.s4 1983009808
    %v1959 = vunpack.c.0.s8 %v1958
    %v1960 = vlaneseq
    %v1961 = vshrl.u32 %v1960, 7
    %v1962 = vsub.s32 %v1959, %v1961
    %v1963 = vrot.slane %v1949, %v1962
    %v1964 = vcombine.low %v1713, %v1897
    %v1965 = vcombine.high %v1713, %v1897
    %v1967 = vunpack.c.l.s4 1983009808
    %v1968 = vunpack.c.0.s8 %v1967
    %v1969 = vlaneseq
    %v1970 = vshrl.u32 %v1969, 7
    %v1971 = vsub.s32 %v1968, %v1970
    %v1972 = vrot.slane %v1964, %v1971
    %v1974 = vunpack.c.l.s4 1983009808
    %v1975 = vunpack.c.0.s8 %v1974
    %v1976 = vlaneseq
    %v1977 = vshrl.u32 %v1976, 7
    %v1978 = vsub.s32 %v1975, %v1977
    %v1979 = vrot.slane %v1965, %v1978
    %v1980 = vcombine.low %v1956, %v1972
    %v1981 = vcombine.high %v1956, %v1972
    %v1983 = vunpack.c.l.s4 1934713408
    %v1984 = vunpack.c.0.s8 %v1983
    %v1985 = vlaneseq
    %v1986 = vshrl.u32 %v1985, 7
    %v1987 = vsub.s32 %v1984, %v1986
    %v1988 = vrot.slane %v1980, %v1987
    %v1990 = vunpack.c.l.s4 1934713408
    %v1991 = vunpack.c.0.s8 %v1990
    %v1992 = vlaneseq
    %v1993 = vshrl.u32 %v1992, 7
    %v1994 = vsub.s32 %v1991, %v1993
    %v1995 = vrot.slane %v1981, %v1994
    %v1996 = vcombine.low %v1963, %v1979
    %v1997 = vcombine.high %v1963, %v1979
    %v1999 = vunpack.c.l.s4 1934713408
    %v2000 = vunpack.c.0.s8 %v1999
    %v2001 = vlaneseq
    %v2002 = vshrl.u32 %v2001, 7
    %v2003 = vsub.s32 %v2000, %v2002
    %v2004 = vrot.slane %v1996, %v2003
    %v2006 = vunpack.c.l.s4 1934713408
    %v2007 = vunpack.c.0.s8 %v2006
    %v2008 = vlaneseq
    %v2009 = vshrl.u32 %v2008, 7
    %v2010 = vsub.s32 %v2007, %v2009
    %v2011 = vrot.slane %v1997, %v2010
    %v2012 = vcombine.high %v1988, 0.0
    %v2013 = vcombine.high %v1995, 0.0
    %v2014 = vcombine.high %v2004, 0.0
    %v2015 = vcombine.high %v2011, 0.0
    %v2016 = vcombine.low %v1667, %v1851
    %v2017 = vcombine.high %v1667, %v1851
    %v2019 = vunpack.c.l.s4 1983009808
    %v2020 = vunpack.c.0.s8 %v2019
    %v2021 = vlaneseq
    %v2022 = vshrl.u32 %v2021, 7
    %v2023 = vsub.s32 %v2020, %v2022
    %v2024 = vrot.slane %v2016, %v2023
    %v2026 = vunpack.c.l.s4 1983009808
    %v2027 = vunpack.c.0.s8 %v2026
    %v2028 = vlaneseq
    %v2029 = vshrl.u32 %v2028, 7
    %v2030 = vsub.s32 %v2027, %v2029
    %v2031 = vrot.slane %v2017, %v2030
    %v2032 = vcombine.low %v1759, %v1943
    %v2033 = vcombine.high %v1759, %v1943
    %v2035 = vunpack.c.l.s4 1983009808
    %v2036 = vunpack.c.0.s8 %v2035
    %v2037 = vlaneseq
    %v2038 = vshrl.u32 %v2037, 7
    %v2039 = vsub.s32 %v2036, %v2038
    %v2040 = vrot.slane %v2032, %v2039
    %v2042 = vunpack.c.l.s4 1983009808
    %v2043 = vunpack.c.0.s8 %v2042
    %v2044 = vlaneseq
    %v2045 = vshrl.u32 %v2044, 7
    %v2046 = vsub.s32 %v2043, %v2045
    %v2047 = vrot.slane %v2033, %v2046
    %v2048 = vcombine.low %v2024, %v2040
    %v2049 = vcombine.high %v2024, %v2040
    %v2051 = vunpack.c.l.s4 1934713408
    %v2052 = vunpack.c.0.s8 %v2051
    %v2053 = vlaneseq
    %v2054 = vshrl.u32 %v2053, 7
    %v2055 = vsub.s32 %v2052, %v2054
    %v2056 = vrot.slane %v2048, %v2055
    %v2058 = vunpack.c.l.s4 1934713408
    %v2059 = vunpack.c.0.s8 %v2058
    %v2060 = vlaneseq
    %v2061 = vshrl.u32 %v2060, 7
    %v2062 = vsub.s32 %v2059, %v2061
    %v2063 = vrot.slane %v2049, %v2062
    %v2064 = vcombine.low %v2031, %v2047
    %v2065 = vcombine.high %v2031, %v2047
    %v2067 = vunpack.c.l.s4 1934713408
    %v2068 = vunpack.c.0.s8 %v2067
    %v2069 = vlaneseq
    %v2070 = vshrl.u32 %v2069, 7
    %v2071 = vsub.s32 %v2068, %v2070
    %v2072 = vrot.slane %v2064, %v2071
    %v2074 = vunpack.c.l.s4 1934713408
    %v2075 = vunpack.c.0.s8 %v2074
    %v2076 = vlaneseq
    %v2077 = vshrl.u32 %v2076, 7
    %v2078 = vsub.s32 %v2075, %v2077
    %v2079 = vrot.slane %v2065, %v2078
    %v2080 = vcombine.high %v2056, 0.0
    %v2081 = vcombine.high %v2063, 0.0
    %v2082 = vcombine.high %v2072, 0.0
    %v2083 = vcombine.high %v2079, 0.0
    %v2084 = vcombine.low %v1988, %v1995
    %v2086 = vunpack.c.l.s4 1983009808
    %v2087 = vunpack.c.0.s8 %v2086
    %v2088 = vlaneseq
    %v2089 = vshrl.u32 %v2088, 7
    %v2090 = vsub.s32 %v2087, %v2089
    %v2091 = vrot.slane %v2084, %v2090
    %v2092 = vcombine.low %v2012, %v2013
    %v2094 = vunpack.c.l.s4 1983009808
    %v2095 = vunpack.c.0.s8 %v2094
    %v2096 = vlaneseq
    %v2097 = vshrl.u32 %v2096, 7
    %v2098 = vsub.s32 %v2095, %v2097
    %v2099 = vrot.slane %v2092, %v2098
    %v2100 = vcombine.low %v2004, %v2011
    %v2102 = vunpack.c.l.s4 1983009808
    %v2103 = vunpack.c.0.s8 %v2102
    %v2104 = vlaneseq
    %v2105 = vshrl.u32 %v2104, 7
    %v2106 = vsub.s32 %v2103, %v2105
    %v2107 = vrot.slane %v2100, %v2106
    %v2108 = vcombine.low %v2014, %v2015
    %v2110 = vunpack.c.l.s4 1983009808
    %v2111 = vunpack.c.0.s8 %v2110
    %v2112 = vlaneseq
    %v2113 = vshrl.u32 %v2112, 7
    %v2114 = vsub.s32 %v2111, %v2113
    %v2115 = vrot.slane %v2108, %v2114
    %v2116 = vcombine.low %v2091, %v2099
    %v2117 = vcombine.high %v2091, %v2099
    %v2119 = vunpack.c.l.s4 1934713408
    %v2120 = vunpack.c.0.s8 %v2119
    %v2121 = vlaneseq
    %v2122 = vshrl.u32 %v2121, 7
    %v2123 = vsub.s32 %v2120, %v2122
    %v2124 = vrot.slane %v2116, %v2123
    %v2126 = vunpack.c.l.s4 1934713408
    %v2127 = vunpack.c.0.s8 %v2126
    %v2128 = vlaneseq
    %v2129 = vshrl.u32 %v2128, 7
    %v2130 = vsub.s32 %v2127, %v2129
    %v2131 = vrot.slane %v2117, %v2130
    %v2132 = vcombine.low %v2107, %v2115
    %v2133 = vcombine.high %v2107, %v2115
    %v2135 = vunpack.c.l.s4 1934713408
    %v2136 = vunpack.c.0.s8 %v2135
    %v2137 = vlaneseq
    %v2138 = vshrl.u32 %v2137, 7
    %v2139 = vsub.s32 %v2136, %v2138
    %v2140 = vrot.slane %v2132, %v2139
    %v2142 = vunpack.c.l.s4 1934713408
    %v2143 = vunpack.c.0.s8 %v2142
    %v2144 = vlaneseq
    %v2145 = vshrl.u32 %v2144, 7
    %v2146 = vsub.s32 %v2143, %v2145
    %v2147 = vrot.slane %v2133, %v2146
    %v2148 = vcombine.low %v2124, %v2140
    %v2149 = vcombine.high %v2124, %v2140
    %v2150 = vcombine.low %v2131, %v2147
    %v2151 = vcombine.high %v2131, %v2147
    %v2152 = vcombine.low %v2056, %v2063
    %v2154 = vunpack.c.l.s4 1983009808
    %v2155 = vunpack.c.0.s8 %v2154
    %v2156 = vlaneseq
    %v2157 = vshrl.u32 %v2156, 7
    %v2158 = vsub.s32 %v2155, %v2157
    %v2159 = vrot.slane %v2152, %v2158
    %v2160 = vcombine.low %v2080, %v2081
    %v2162 = vunpack.c.l.s4 1983009808
    %v2163 = vunpack.c.0.s8 %v2162
    %v2164 = vlaneseq
    %v2165 = vshrl.u32 %v2164, 7
    %v2166 = vsub.s32 %v2163, %v2165
    %v2167 = vrot.slane %v2160, %v2166
    %v2168 = vcombine.low %v2072, %v2079
    %v2170 = vunpack.c.l.s4 1983009808
    %v2171 = vunpack.c.0.s8 %v2170
    %v2172 = vlaneseq
    %v2173 = vshrl.u32 %v2172, 7
    %v2174 = vsub.s32 %v2171, %v2173
    %v2175 = vrot.slane %v2168, %v2174
    %v2176 = vcombine.low %v2082, %v2083
    %v2178 = vunpack.c.l.s4 1983009808
    %v2179 = vunpack.c.0.s8 %v2178
    %v2180 = vlaneseq
    %v2181 = vshrl.u32 %v2180, 7
    %v2182 = vsub.s32 %v2179, %v2181
    %v2183 = vrot.slane %v2176, %v2182
    %v2184 = vcombine.low %v2159, %v2167
    %v2185 = vcombine.high %v2159, %v2167
    %v2187 = vunpack.c.l.s4 1934713408
    %v2188 = vunpack.c.0.s8 %v2187
    %v2189 = vlaneseq
    %v2190 = vshrl.u32 %v2189, 7
    %v2191 = vsub.s32 %v2188, %v2190
    %v2192 = vrot.slane %v2184, %v2191
    %v2194 = vunpack.c.l.s4 1934713408
    %v2195 = vunpack.c.0.s8 %v2194
    %v2196 = vlaneseq
    %v2197 = vshrl.u32 %v2196, 7
    %v2198 = vsub.s32 %v2195, %v2197
    %v2199 = vrot.slane %v2185, %v2198
    %v2200 = vcombine.low %v2175, %v2183
    %v2201 = vcombine.high %v2175, %v2183
    %v2203 = vunpack.c.l.s4 1934713408
    %v2204 = vunpack.c.0.s8 %v2203
    %v2205 = vlaneseq
    %v2206 = vshrl.u32 %v2205, 7
    %v2207 = vsub.s32 %v2204, %v2206
    %v2208 = vrot.slane %v2200, %v2207
    %v2210 = vunpack.c.l.s4 1934713408
    %v2211 = vunpack.c.0.s8 %v2210
    %v2212 = vlaneseq
    %v2213 = vshrl.u32 %v2212, 7
    %v2214 = vsub.s32 %v2211, %v2213
    %v2215 = vrot.slane %v2201, %v2214
    %v2216 = vcombine.low %v2192, %v2208
    %v2217 = vcombine.high %v2192, %v2208
    %v2218 = vcombine.low %v2199, %v2215
    %v2219 = vcombine.high %v2199, %v2215
    %2222 = vrot.lane.b32.xlu0 %v2149, 8
    %v2223 = vpop.permute.xlu0 %2222
    %2224 = vrot.lane.b32.xlu0 %v2217, 8
    %v2225 = vpop.permute.xlu0 %2224
    %2230 = vrot.lane.b32.xlu0 %v2150, 16
    %v2231 = vpop.permute.xlu0 %2230
    %2232 = vrot.lane.b32.xlu0 %v2218, 16
    %v2233 = vpop.permute.xlu0 %2232
    %2238 = vrot.lane.b32.xlu0 %v2151, 24
    %v2239 = vpop.permute.xlu0 %2238
    %2240 = vrot.lane.b32.xlu0 %v2219, 24
    %v2241 = vpop.permute.xlu0 %2240
    %v2244 = vsel %vm1106, %v2148, %v2223
    %v2245 = vsel %vm1106, %v2216, %v2225
    %vm2246 = vcmask 130048
    %v2247 = vsel %vm2246, %v2244, %v2231
    %v2248 = vsel %vm2246, %v2245, %v2233
    %vm2249 = vcmask 195584
    %v2250 = vsel %vm2249, %v2247, %v2239
    %v2251 = vsel %vm2249, %v2248, %v2241
    %v2252 = vand.u32 2147483647, %v2250
    %v2253 = vand.u32 2147483647, %v2251
    %v2254 = vsel %vm64, %v2252, -inf
    %2255 = vmax.xlane.f32.xlu0 %v2254
    %v2256 = vpop.xlane.xlu0 %2255
    %v2257 = vsel %vm64, %v2253, -inf
    %2258 = vmax.xlane.f32.xlu0 %v2257
    %v2259 = vpop.xlane.xlu0 %2258
    %v2260 = vmax.f32 %v2256, 1e-12
    %v2261 = vmax.f32 %v2259, 1e-12
    %v2262 = vrcp.pop %v2260
    %v2263 = vrcp.pop %v2261
    %v2264 = vmul.f32 %v2262, 127.0
    %v2265 = vmul.f32 %v2263, 127.0
    %v2266 = vmul.f32 %v2250, %v2264
    %v2267 = vmul.f32 %v2251, %v2265
    %v2268 = vround.ne.pseudo %v2266
    %v2269 = vround.ne.pseudo %v2267
    %v2270 = vmax.f32 %v2268, -127.0
    %v2271 = vmax.f32 %v2269, -127.0
    %v2272 = vmin.f32 %v2270, 127.0
    %v2273 = vmin.f32 %v2271, 127.0
    %v2274 = vpack.c.bf16 %v2273, %v2272
    %v2275 = vmul.f32 %v2260, 0.007874016
    %v2276 = vmul.f32 %v2261, 0.007874016
    %v2277 = vld [vmem:[%s6] sm:$0xf]
    %v2278 = vld [vmem:[%s6 + $0x4] sm:$0xf]
    %v2279 = vld [vmem:[%s6 + $0x8] sm:$0xf]
    %v2280 = vld [vmem:[%s6 + $0xc] sm:$0xf]
    %v2285 = vunpack.c.l.b16 %v2277
    %v2286 = vunpack.c.l.b16 %v2278
    %v2287 = vunpack.c.l.b16 %v2279
    %v2288 = vunpack.c.l.b16 %v2280
    %v2289 = vpack.c.b16 %v2286, %v2285
    %v2290 = vpack.c.b16 %v2288, %v2287
    %v2294 = vsel %vm64, %v2274, 0
    %2296 = vmatprep.subr.bf16.mxu0 0
    %2297 = vmatpush1.bf16.msra.mxu0 %v2289
    %2298 = vmatprep.subr.bf16.mxu0 0
    %2299 = vmatpush1.bf16.msra.mxu0 %v2290
    %2300 = vmatprep.subr.bf16.mxu0 0
    %2301 = vmatpush1.bf16.msra.mxu0 0
    %2302 = vmatprep.subr.bf16.mxu0 0
    %2303 = vmatpush1.bf16.msra.mxu0 0
    %2304 = vmatprep.subr.bf16.mxu0 0
    %2305 = vmatpush1.bf16.msra.mxu0 0
    %2306 = vmatprep.subr.bf16.mxu0 0
    %2307 = vmatpush1.bf16.msra.mxu0 0
    %2308 = vmatprep.subr.bf16.mxu0 0
    %2309 = vmatpush1.bf16.msra.mxu0 0
    %2310 = vmatprep.subr.bf16.mxu0 0
    %2311 = vmatpush1.bf16.msra.mxu0 0
    %2312 = vmatprep.subr.bf16.mxu0 0
    %2313 = vmatpush1.bf16.msra.mxu0 0
    %2314 = vmatprep.subr.bf16.mxu0 0
    %2315 = vmatpush1.bf16.msra.mxu0 0
    %2316 = vmatprep.subr.bf16.mxu0 0
    %2317 = vmatpush1.bf16.msra.mxu0 0
    %2318 = vmatprep.subr.bf16.mxu0 0
    %2319 = vmatpush1.bf16.msra.mxu0 0
    %2320 = vmatprep.subr.bf16.mxu0 0
    %2321 = vmatpush1.bf16.msra.mxu0 0
    %2322 = vmatprep.subr.bf16.mxu0 0
    %2323 = vmatpush1.bf16.msra.mxu0 0
    %2324 = vmatprep.subr.bf16.mxu0 0
    %2325 = vmatpush1.bf16.msra.mxu0 0
    %2326 = vmatprep.subr.bf16.mxu0 0
    %2327 = vmatpush1.bf16.msra.mxu0 0
    %2328 = vmatprep.mubr.bf16.mxu0 0
    %2329 = vmatmul.mubr.bf16.gmra.mrb[0].mxu0 %v2294
    %v2330 = vpop.f32.mrb[0].mxu0
    %v2331 = vadd.f32 0.0, %v2330
    %v2332 = vpop.f32.mrb[0].mxu0
    %v2333 = vpop.f32.mrb[0].mxu0
    %v2334 = vadd.f32 0.0, %v2333
    %v2335 = vpop.f32.mrb[0].mxu0
    %2336 = vdwg.mxu0
    %v2337 = vstv %s59
    %v2338 = vmul.f32 %v2275, %v2337
    %v2339 = vmul.f32 %v2276, %v2337
    %v2340 = vmul.f32 %v2331, %v2338
    %v2341 = vmul.f32 %v2334, %v2339
    %v2342 = vadd.f32 %v56, %v2340
    %v2343 = vadd.f32 %v57, %v2341
    %v2344 = vld [vmem:[%s3] sm:$0x1]
    %v2345 = vld [vmem:[%s4] sm:$0x1]
    %v2346 = vsel %vm64, %v2342, 0.0
    %2347 = vadd.xlane.f32.xlu0 %v2346
    %v2348 = vpop.xlane.xlu0 %2347
    %v2349 = vsel %vm64, %v2343, 0.0
    %2350 = vadd.xlane.f32.xlu0 %v2349
    %v2351 = vpop.xlane.xlu0 %2350
    %v2352 = vmul.f32 %v2348, %v71
    %v2353 = vmul.f32 %v2351, %v71
    %v2354 = vsub.f32 %v2342, %v2352
    %v2355 = vsub.f32 %v2343, %v2353
    %v2356 = vmul.f32 %v2354, %v2354
    %v2357 = vmul.f32 %v2355, %v2355
    %v2358 = vsel %vm64, %v2356, 0.0
    %2359 = vadd.xlane.f32.xlu0 %v2358
    %v2360 = vpop.xlane.xlu0 %2359
    %v2361 = vsel %vm64, %v2357, 0.0
    %2362 = vadd.xlane.f32.xlu0 %v2361
    %v2363 = vpop.xlane.xlu0 %2362
    %v2364 = vmul.f32 %v2360, %v71
    %v2365 = vmul.f32 %v2363, %v71
    %v2366 = vadd.f32 %v2364, 1e-05
    %v2367 = vadd.f32 %v2365, 1e-05
    %v2368 = vrsqrt.pop %v2366
    %v2369 = vrsqrt.pop %v2367
    %v2370 = vmul.f32 %v2354, %v2368
    %v2371 = vmul.f32 %v2355, %v2369
    %v2373 = vlaneseq
    %v2374 = vshrl.u32 %v2373, 7
    %v2375 = vsub.s32 0, %v2374
    %v2376 = vrot.slane %v2344, %v2375
    %v2378 = vmul.f32 %v2370, %v2376
    %v2379 = vmul.f32 %v2371, %v2376
    %v2381 = vlaneseq
    %v2382 = vshrl.u32 %v2381, 7
    %v2383 = vsub.s32 0, %v2382
    %v2384 = vrot.slane %v2345, %v2383
    %v2386 = vadd.f32 %v2378, %v2384
    %v2387 = vadd.f32 %v2379, %v2384
    %v2388 = vand.u32 2147483647, %v2386
    %v2389 = vand.u32 2147483647, %v2387
    %v2390 = vsel %vm64, %v2388, -inf
    %2391 = vmax.xlane.f32.xlu0 %v2390
    %v2392 = vpop.xlane.xlu0 %2391
    %v2393 = vsel %vm64, %v2389, -inf
    %2394 = vmax.xlane.f32.xlu0 %v2393
    %v2395 = vpop.xlane.xlu0 %2394
    %v2396 = vmax.f32 %v2392, 1e-12
    %v2397 = vmax.f32 %v2395, 1e-12
    %v2398 = vrcp.pop %v2396
    %v2399 = vrcp.pop %v2397
    %v2400 = vmul.f32 %v2398, 127.0
    %v2401 = vmul.f32 %v2399, 127.0
    %v2402 = vmul.f32 %v2386, %v2400
    %v2403 = vmul.f32 %v2387, %v2401
    %v2404 = vround.ne.pseudo %v2402
    %v2405 = vround.ne.pseudo %v2403
    %v2406 = vmax.f32 %v2404, -127.0
    %v2407 = vmax.f32 %v2405, -127.0
    %v2408 = vmin.f32 %v2406, 127.0
    %v2409 = vmin.f32 %v2407, 127.0
    %v2410 = vpack.c.bf16 %v2409, %v2408
    %v2411 = vmul.f32 %v2396, 0.007874016
    %v2412 = vmul.f32 %v2397, 0.007874016
    %v2413 = vld [vmem:[%s7] sm:$0xf]
    %v2414 = vld [vmem:[%s7 + $0x4] sm:$0xf]
    %v2415 = vld [vmem:[%s7 + $0x8] sm:$0xf]
    %v2416 = vld [vmem:[%s7 + $0xc] sm:$0xf]
    %v2421 = vunpack.c.l.b16 %v2413
    %v2422 = vunpack.c.l.b16 %v2414
    %v2423 = vunpack.c.l.b16 %v2415
    %v2424 = vunpack.c.l.b16 %v2416
    %v2425 = vpack.c.b16 %v2422, %v2421
    %v2426 = vpack.c.b16 %v2424, %v2423
    %v2430 = vsel %vm64, %v2410, 0
    %2432 = vmatprep.subr.bf16.mxu0 0
    %2433 = vmatpush1.bf16.msra.mxu0 %v2425
    %2434 = vmatprep.subr.bf16.mxu0 0
    %2435 = vmatpush1.bf16.msra.mxu0 %v2426
    %2436 = vmatprep.subr.bf16.mxu0 0
    %2437 = vmatpush1.bf16.msra.mxu0 0
    %2438 = vmatprep.subr.bf16.mxu0 0
    %2439 = vmatpush1.bf16.msra.mxu0 0
    %2440 = vmatprep.subr.bf16.mxu0 0
    %2441 = vmatpush1.bf16.msra.mxu0 0
    %2442 = vmatprep.subr.bf16.mxu0 0
    %2443 = vmatpush1.bf16.msra.mxu0 0
    %2444 = vmatprep.subr.bf16.mxu0 0
    %2445 = vmatpush1.bf16.msra.mxu0 0
    %2446 = vmatprep.subr.bf16.mxu0 0
    %2447 = vmatpush1.bf16.msra.mxu0 0
    %2448 = vmatprep.subr.bf16.mxu0 0
    %2449 = vmatpush1.bf16.msra.mxu0 0
    %2450 = vmatprep.subr.bf16.mxu0 0
    %2451 = vmatpush1.bf16.msra.mxu0 0
    %2452 = vmatprep.subr.bf16.mxu0 0
    %2453 = vmatpush1.bf16.msra.mxu0 0
    %2454 = vmatprep.subr.bf16.mxu0 0
    %2455 = vmatpush1.bf16.msra.mxu0 0
    %2456 = vmatprep.subr.bf16.mxu0 0
    %2457 = vmatpush1.bf16.msra.mxu0 0
    %2458 = vmatprep.subr.bf16.mxu0 0
    %2459 = vmatpush1.bf16.msra.mxu0 0
    %2460 = vmatprep.subr.bf16.mxu0 0
    %2461 = vmatpush1.bf16.msra.mxu0 0
    %2462 = vmatprep.subr.bf16.mxu0 0
    %2463 = vmatpush1.bf16.msra.mxu0 0
    %2464 = vmatprep.mubr.bf16.mxu0 0
    %2465 = vmatmul.mubr.bf16.gmra.mrb[0].mxu0 %v2430
    %v2466 = vpop.f32.mrb[0].mxu0
    %v2467 = vadd.f32 0.0, %v2466
    %v2468 = vpop.f32.mrb[0].mxu0
    %v2469 = vpop.f32.mrb[0].mxu0
    %v2470 = vadd.f32 0.0, %v2469
    %v2471 = vpop.f32.mrb[0].mxu0
    %2472 = vdwg.mxu0
    %v2473 = vstv %s60
    %v2474 = vmul.f32 %v2411, %v2473
    %v2475 = vmul.f32 %v2412, %v2473
    %v2476 = vmul.f32 %v2467, %v2474
    %v2477 = vmul.f32 %v2470, %v2475
    %v2478 = vld [vmem:[%s9] sm:$0x1]
    %v2480 = vlaneseq
    %v2481 = vshrl.u32 %v2480, 7
    %v2482 = vsub.s32 0, %v2481
    %v2483 = vrot.slane %v2478, %v2482
    %v2485 = vadd.f32 %v2476, %v2483
    %v2486 = vadd.f32 %v2477, %v2483
    %v2487 = vmul.f32 %v2485, 0.5
    %v2488 = vmul.f32 %v2486, 0.5
    %v2489 = vmul.f32 %v2485, 0.70710677
    %v2490 = vmul.f32 %v2486, 0.70710677
    %v2491 = vand.u32 2147483647, %v2489
    %v2492 = vand.u32 2147483647, %v2490
    %v2493 = vmul.f32 %v2491, 0.5
    %v2494 = vmul.f32 %v2492, 0.5
    %v2495 = vadd.f32 %v2493, 1.0
    %v2496 = vadd.f32 %v2494, 1.0
    %v2497 = vrcp.pop %v2495
    %v2498 = vrcp.pop %v2496
    %v2499 = vmul.f32 %v2497, 0.17087276
    %v2500 = vmul.f32 %v2498, 0.17087276
    %v2501 = vadd.f32 %v2499, -0.82215226
    %v2502 = vadd.f32 %v2500, -0.82215226
    %v2503 = vmul.f32 %v2497, %v2501
    %v2504 = vmul.f32 %v2498, %v2502
    %v2505 = vadd.f32 %v2503, 1.4885159
    %v2506 = vadd.f32 %v2504, 1.4885159
    %v2507 = vmul.f32 %v2497, %v2505
    %v2508 = vmul.f32 %v2498, %v2506
    %v2509 = vadd.f32 %v2507, -1.135204
    %v2510 = vadd.f32 %v2508, -1.135204
    %v2511 = vmul.f32 %v2497, %v2509
    %v2512 = vmul.f32 %v2498, %v2510
    %v2513 = vadd.f32 %v2511, 0.27886808
    %v2514 = vadd.f32 %v2512, 0.27886808
    %v2515 = vmul.f32 %v2497, %v2513
    %v2516 = vmul.f32 %v2498, %v2514
    %v2517 = vadd.f32 %v2515, -0.18628806
    %v2518 = vadd.f32 %v2516, -0.18628806
    %v2519 = vmul.f32 %v2497, %v2517
    %v2520 = vmul.f32 %v2498, %v2518
    %v2521 = vadd.f32 %v2519, 0.09678418
    %v2522 = vadd.f32 %v2520, 0.09678418
    %v2523 = vmul.f32 %v2497, %v2521
    %v2524 = vmul.f32 %v2498, %v2522
    %v2525 = vadd.f32 %v2523, 0.37409195
    %v2526 = vadd.f32 %v2524, 0.37409195
    %v2527 = vmul.f32 %v2497, %v2525
    %v2528 = vmul.f32 %v2498, %v2526
    %v2529 = vadd.f32 %v2527, 1.0000237
    %v2530 = vadd.f32 %v2528, 1.0000237
    %v2531 = vmul.f32 %v2497, %v2529
    %v2532 = vmul.f32 %v2498, %v2530
    %v2533 = vadd.f32 %v2531, -1.2655122
    %v2534 = vadd.f32 %v2532, -1.2655122
    %v2535 = vsub.f32 0.0, %v2491
    %v2536 = vsub.f32 0.0, %v2492
    %v2537 = vmul.f32 %v2535, %v2491
    %v2538 = vmul.f32 %v2536, %v2492
    %v2539 = vadd.f32 %v2537, %v2533
    %v2540 = vadd.f32 %v2538, %v2534
    %v2541 = vmul.f32 %v2539, 1.442695
    %v2542 = vpow.pop %v2541
    %v2543 = vmul.f32 %v2540, 1.442695
    %v2544 = vpow.pop %v2543
    %v2545 = vmul.f32 %v2497, %v2542
    %v2546 = vmul.f32 %v2498, %v2544
    %vm2547 = vcmp.ge.f32.partialorder %v2489, 0.0
    %vm2548 = vcmp.ge.f32.partialorder %v2490, 0.0
    %v2549 = vsub.f32 1.0, %v2545
    %v2550 = vsub.f32 1.0, %v2546
    %v2551 = vsub.f32 %v2545, 1.0
    %v2552 = vsub.f32 %v2546, 1.0
    %v2553 = vsel %vm2547, %v2549, %v2551
    %v2554 = vsel %vm2548, %v2550, %v2552
    %v2555 = vadd.f32 %v2553, 1.0
    %v2556 = vadd.f32 %v2554, 1.0
    %v2557 = vmul.f32 %v2487, %v2555
    %v2558 = vmul.f32 %v2488, %v2556
    %v2559 = vand.u32 2147483647, %v2557
    %v2560 = vand.u32 2147483647, %v2558
    %2561 = vmax.xlane.f32.xlu0 %v2559
    %v2562 = vpop.xlane.xlu0 %2561
    %2563 = vmax.xlane.f32.xlu0 %v2560
    %v2564 = vpop.xlane.xlu0 %2563
    %v2565 = vmax.f32 %v2562, 1e-12
    %v2566 = vmax.f32 %v2564, 1e-12
    %v2567 = vrcp.pop %v2565
    %v2568 = vrcp.pop %v2566
    %v2569 = vmul.f32 %v2567, 127.0
    %v2570 = vmul.f32 %v2568, 127.0
    %v2571 = vmul.f32 %v2557, %v2569
    %v2572 = vmul.f32 %v2558, %v2570
    %v2573 = vround.ne.pseudo %v2571
    %v2574 = vround.ne.pseudo %v2572
    %v2575 = vmax.f32 %v2573, -127.0
    %v2576 = vmax.f32 %v2574, -127.0
    %v2577 = vmin.f32 %v2575, 127.0
    %v2578 = vmin.f32 %v2576, 127.0
    %v2579 = vpack.c.bf16 %v2578, %v2577
    %v2580 = vmul.f32 %v2565, 0.007874016
    %v2581 = vmul.f32 %v2566, 0.007874016
    %v2582 = vld [vmem:[%s8] sm:$0xf]
    %v2583 = vld [vmem:[%s8 + $0x4] sm:$0xf]
    %v2584 = vld [vmem:[%s8 + $0x8] sm:$0xf]
    %v2585 = vld [vmem:[%s8 + $0xc] sm:$0xf]
    %v2586 = vld [vmem:[%s8 + $0x10] sm:$0xf]
    %v2587 = vld [vmem:[%s8 + $0x14] sm:$0xf]
    %v2588 = vld [vmem:[%s8 + $0x18] sm:$0xf]
    %v2589 = vld [vmem:[%s8 + $0x1c] sm:$0xf]
    %v2590 = vld [vmem:[%s8 + $0x20] sm:$0xf]
    %v2591 = vld [vmem:[%s8 + $0x24] sm:$0xf]
    %v2592 = vld [vmem:[%s8 + $0x28] sm:$0xf]
    %v2593 = vld [vmem:[%s8 + $0x2c] sm:$0xf]
    %v2594 = vld [vmem:[%s8 + $0x30] sm:$0xf]
    %v2595 = vld [vmem:[%s8 + $0x34] sm:$0xf]
    %v2596 = vld [vmem:[%s8 + $0x38] sm:$0xf]
    %v2597 = vld [vmem:[%s8 + $0x3c] sm:$0xf]
    %v2614 = vunpack.c.l.b16 %v2582
    %v2615 = vunpack.c.l.b16 %v2583
    %v2616 = vunpack.c.l.b16 %v2584
    %v2617 = vunpack.c.l.b16 %v2585
    %v2618 = vunpack.c.l.b16 %v2586
    %v2619 = vunpack.c.l.b16 %v2587
    %v2620 = vunpack.c.l.b16 %v2588
    %v2621 = vunpack.c.l.b16 %v2589
    %v2622 = vunpack.c.l.b16 %v2590
    %v2623 = vunpack.c.l.b16 %v2591
    %v2624 = vunpack.c.l.b16 %v2592
    %v2625 = vunpack.c.l.b16 %v2593
    %v2626 = vunpack.c.l.b16 %v2594
    %v2627 = vunpack.c.l.b16 %v2595
    %v2628 = vunpack.c.l.b16 %v2596
    %v2629 = vunpack.c.l.b16 %v2597
    %v2630 = vpack.c.b16 %v2615, %v2614
    %v2631 = vpack.c.b16 %v2617, %v2616
    %v2632 = vpack.c.b16 %v2619, %v2618
    %v2633 = vpack.c.b16 %v2621, %v2620
    %v2634 = vpack.c.b16 %v2623, %v2622
    %v2635 = vpack.c.b16 %v2625, %v2624
    %v2636 = vpack.c.b16 %v2627, %v2626
    %v2637 = vpack.c.b16 %v2629, %v2628
    %2646 = vmatprep.subr.bf16.mxu0 0
    %2647 = vmatpush1.bf16.msra.mxu0 %v2630
    %2648 = vmatprep.subr.bf16.mxu0 0
    %2649 = vmatpush1.bf16.msra.mxu0 %v2631
    %2650 = vmatprep.subr.bf16.mxu0 0
    %2651 = vmatpush1.bf16.msra.mxu0 %v2632
    %2652 = vmatprep.subr.bf16.mxu0 0
    %2653 = vmatpush1.bf16.msra.mxu0 %v2633
    %2654 = vmatprep.subr.bf16.mxu0 0
    %2655 = vmatpush1.bf16.msra.mxu0 %v2634
    %2656 = vmatprep.subr.bf16.mxu0 0
    %2657 = vmatpush1.bf16.msra.mxu0 %v2635
    %2658 = vmatprep.subr.bf16.mxu0 0
    %2659 = vmatpush1.bf16.msra.mxu0 %v2636
    %2660 = vmatprep.subr.bf16.mxu0 0
    %2661 = vmatpush1.bf16.msra.mxu0 %v2637
    %2662 = vmatprep.subr.bf16.mxu0 0
    %2663 = vmatpush1.bf16.msra.mxu0 0
    %2664 = vmatprep.subr.bf16.mxu0 0
    %2665 = vmatpush1.bf16.msra.mxu0 0
    %2666 = vmatprep.subr.bf16.mxu0 0
    %2667 = vmatpush1.bf16.msra.mxu0 0
    %2668 = vmatprep.subr.bf16.mxu0 0
    %2669 = vmatpush1.bf16.msra.mxu0 0
    %2670 = vmatprep.subr.bf16.mxu0 0
    %2671 = vmatpush1.bf16.msra.mxu0 0
    %2672 = vmatprep.subr.bf16.mxu0 0
    %2673 = vmatpush1.bf16.msra.mxu0 0
    %2674 = vmatprep.subr.bf16.mxu0 0
    %2675 = vmatpush1.bf16.msra.mxu0 0
    %2676 = vmatprep.subr.bf16.mxu0 0
    %2677 = vmatpush1.bf16.msra.mxu0 0
    %2678 = vmatprep.mubr.bf16.mxu0 0
    %2679 = vmatmul.mubr.bf16.gmra.mrb[0].mxu0 %v2579
    %v2680 = vpop.f32.mrb[0].mxu0
    %v2681 = vadd.f32 0.0, %v2680
    %v2682 = vpop.f32.mrb[0].mxu0
    %v2683 = vpop.f32.mrb[0].mxu0
    %v2684 = vadd.f32 0.0, %v2683
    %v2685 = vpop.f32.mrb[0].mxu0
    %2686 = vdwg.mxu0
    %v2687 = vstv %s61
    %v2688 = vmul.f32 %v2580, %v2687
    %v2689 = vmul.f32 %v2581, %v2687
    %v2690 = vmul.f32 %v2681, %v2688
    %v2691 = vmul.f32 %v2684, %v2689
    %v2692 = vld [vmem:[%s10] sm:$0x1]
    %v2694 = vlaneseq
    %v2695 = vshrl.u32 %v2694, 7
    %v2696 = vsub.s32 0, %v2695
    %v2697 = vrot.slane %v2692, %v2696
    %v2699 = vadd.f32 %v2690, %v2697
    %v2700 = vadd.f32 %v2691, %v2697
    %v2701 = vadd.f32 %v2342, %v2699
    %v2702 = vadd.f32 %v2343, %v2700
    %2703 = vst.msk [vmem:[#allocation5] sm:$0xff] %vm64, %v2701
    %2704 = vst.msk [vmem:[#allocation5 + $0x8] sm:$0xff] %vm64, %v2702
    // Predicated region
    $region54: #{transformer_block.1} parent=1 // pred_check
      _
    $region55: #{transformer_block.1} parent=1 // pred_check_branch
      %2706 = sbr.rel (0) target = $region57
    $region56: #{transformer_block.1} parent=1 // pred_region
      %s2708 = ssub.s32 256, 256
      %2709 = vsyncadd [#allocation3], %s2708
      %s2710 = sshll.u32 [#allocation5], 4
      %s2711 = int_to_ptr.vmem [resolvable:$true] %s2710
      %2716 = dma.vmem_to_hbm [thread:$0]  %s2711, 256, %s12, [#allocation3], 128, 128, 8
    $region57: #{transformer_block.1} parent=1 // pred_fallthru
      _
    // Predicated region
    $region58: #{transformer_block.1} parent=1 // pred_check
      _
    $region59: #{transformer_block.1} parent=1 // pred_check_branch
      %2718 = sbr.rel (0) target = $region61
    $region60: #{transformer_block.1} parent=1 // pred_region
      %2719 = dma.done [#allocation3], 256
    $region61: #{transformer_block.1} parent=1 // pred_fallthru
      _
    %2720 = vsyncpa [#allocation3], 1
    %2721 = vsyncpa [#allocation4], 1

</llo_original>
